<compile_context>
chip_gen: v6e
topology: v6e:2x2x1
jax: 0.10.0
libtpu: 0.0.40
codegen_flags: <defaults>
</compile_context>

<pallas_src>
import functools

import jax
import jax.numpy as jnp
from jax import lax
from jax.experimental import pallas as pl
from jax.experimental.pallas import tpu as pltpu

LEAKY_SLOPE = 0.01   # nn.LeakyReLU default negative_slope
BN_EPS = 1e-5        # nn.BatchNorm2d default eps


def _banded_weights(w, W):
    """Fold the 3 dx taps + width zero-padding into banded matmul weights.

    w : (3, 3, Cin, Cout)  HWIO conv weights
    returns (3, W*Cin, W*Cout); for each dy:
      Wb[dy][xi*Cin+ci, xo*Cout+co] = w[dy, xi-xo+1, ci, co]  if 0<=xi-xo+1<=2
    so that  out_row = sum_dy  in_row(y+dy-1) @ Wb[dy]   (rows are (x, c) flat).
    """
    _, _, cin, cout = w.shape
    r = jnp.arange(W * cin)
    c = jnp.arange(W * cout)
    x_in, ci = r // cin, r % cin
    x_out, co = c // cout, c % cout
    dx = x_in[:, None] - x_out[None, :] + 1
    valid = (dx >= 0) & (dx <= 2)
    dxc = jnp.clip(dx, 0, 2)
    ci_b = jnp.broadcast_to(ci[:, None], dx.shape)
    co_b = jnp.broadcast_to(co[None, :], dx.shape)
    mats = []
    for dy in range(3):
        vals = w[dy][dxc, ci_b, co_b]                      # gather (W*Cin, W*Cout)
        mats.append(jnp.where(valid, vals, jnp.zeros_like(vals)))
    return jnp.stack(mats, axis=0).astype(jnp.float32)


def _fused_kernel(x_ref, ffold_ref, fexp_ref, *rest, N, H, W, chans):
    """Fused `times` x (conv3x3 -> BN(train) -> LeakyReLU), all in VMEM.

    x_ref     : (N*H, W*Cin0)            input, lane-dense (x, c) layout
    ffold_ref : (W*Cout, Cout)           lane -> channel fold selector
    fexp_ref  : (Cout, W*Cout)           channel -> lane expand selector
    per block : wb (3, W*Cin_i, W*Cout), gamma (1, Cout), beta (1, Cout)
    out_ref   : (N*H, W*Cout)            lane-dense output
    scratch   : per block, halo-padded activations (N*(H+2), W*Cin_i)
    """
    times = len(chans) - 1
    wbs = [rest[3 * i] for i in range(times)]
    gammas = [rest[3 * i + 1] for i in range(times)]
    betas = [rest[3 * i + 2] for i in range(times)]
    out_ref = rest[3 * times]
    xpads = rest[3 * times + 1:]

    Hp = H + 2
    Cout = chans[-1]
    Mtot = float(N * H * W)

    # Zero all padded scratches once (halo rows must be zero), then stage the
    # unpadded input into the interior of the first one.
    for i in range(times):
        xpads[i][...] = jnp.zeros_like(xpads[i])
    for n in range(N):
        xpads[0][n * Hp + 1: n * Hp + 1 + H, :] = x_ref[n * H: n * H + H, :]

    for blk in range(times):
        xp = xpads[blk]
        wb = wbs[blk]

        # --- 3x3 conv: 3 banded matmuls per image (dx + W-padding folded into wb)
        accs = []
        for n in range(N):
            acc = jnp.zeros((H, W * Cout), jnp.float32)
            for dy in range(3):
                acc = acc + jnp.dot(
                    xp[n * Hp + dy: n * Hp + dy + H, :], wb[dy],
                    preferred_element_type=jnp.float32)
            accs.append(acc)
        # conv bias omitted on purpose: per-channel constant cancels in
        # training-mode BatchNorm (only affects running stats, not this fwd).

        # --- BatchNorm2d (training mode), single pass: var = E[x^2] - mean^2
        s = jnp.zeros((1, W * Cout), jnp.float32)
        ss = jnp.zeros((1, W * Cout), jnp.float32)
        for n in range(N):
            s = s + jnp.sum(accs[n], axis=0, keepdims=True)
            ss = ss + jnp.sum(accs[n] * accs[n], axis=0, keepdims=True)
        s_c = jnp.dot(s, ffold_ref[...], preferred_element_type=jnp.float32)
        ss_c = jnp.dot(ss, ffold_ref[...], preferred_element_type=jnp.float32)
        mean = s_c / Mtot                                   # (1, Cout)
        var = ss_c / Mtot - mean * mean                     # biased variance
        scale_c = gammas[blk][...] * lax.rsqrt(var + BN_EPS)
        shift_c = betas[blk][...] - mean * scale_c
        # broadcast per-channel scale/shift to the lane-dense (x, c) layout
        scale_l = jnp.dot(scale_c, fexp_ref[...],
                          preferred_element_type=jnp.float32)   # (1, W*Cout)
        shift_l = jnp.dot(shift_c, fexp_ref[...],
                          preferred_element_type=jnp.float32)

        # --- normalize + LeakyReLU; keep result in VMEM for the next block
        for n in range(N):
            y = accs[n] * scale_l + shift_l
            y = jnp.where(y >= 0, y, LEAKY_SLOPE * y)
            if blk + 1 < times:
                xpads[blk + 1][n * Hp + 1: n * Hp + 1 + H, :] = y
            else:
                out_ref[n * H: n * H + H, :] = y


def base_down_block(x_nchw, params):
    """Forward pass of Base_down_block. Input/output are NCHW (PyTorch)."""
    N, C0, H, W = x_nchw.shape
    times = len(params)
    Cout = params[0][0].shape[-1]
    chans = [C0] + [Cout] * times

    x_nhwc = jnp.transpose(x_nchw, (0, 2, 3, 1)).astype(jnp.float32)
    x2d = x_nhwc.reshape(N * H, W * C0)                    # lane-dense (x, c)

    # channel fold / expand selectors for BN stats in the (x, c) lane layout
    co_of_lane = jnp.arange(W * Cout) % Cout
    f_fold = (co_of_lane[:, None] == jnp.arange(Cout)[None, :]).astype(jnp.float32)
    f_exp = jnp.transpose(f_fold)

    inputs = [x2d, f_fold, f_exp]
    for (w, b, gamma, beta) in params:
        del b  # cancels under training-mode BN (see kernel comment)
        inputs.append(_banded_weights(w, W))
        inputs.append(gamma.reshape(1, Cout).astype(jnp.float32))
        inputs.append(beta.reshape(1, Cout).astype(jnp.float32))

    kernel = functools.partial(_fused_kernel, N=N, H=H, W=W, chans=chans)
    vmem = pl.BlockSpec(memory_space=pltpu.MemorySpace.VMEM)
    out2d = pl.pallas_call(
        kernel,
        out_shape=jax.ShapeDtypeStruct((N * H, W * Cout), jnp.float32),
        in_specs=[vmem] * len(inputs),
        out_specs=vmem,
        scratch_shapes=[pltpu.VMEM((N * (H + 2), W * c), jnp.float32)
                        for c in chans[:-1]],
        # footprint is ~100 KiB at these shapes; explicit limit keeps us far
        # under the v7x 64 MiB physical VMEM.
        compiler_params=pltpu.CompilerParams(vmem_limit_bytes=32 * 1024 * 1024),
    )(*inputs)

    out_nhwc = out2d.reshape(N, H, W, Cout)
    return jnp.transpose(out_nhwc, (0, 3, 1, 2))


def init_block_params(key, cin, cout):
    """Deterministic init matching Base_with_bn_block._initialize_weights."""
    fan_out = cout * 3 * 3
    std = (2.0 / fan_out) ** 0.5  # kaiming_normal_, mode='fan_out', relu
    w = jax.random.normal(key, (3, 3, cin, cout), jnp.float32) * std
    b = jnp.zeros((cout,), jnp.float32)
    gamma = jnp.ones((cout,), jnp.float32)
    beta = jnp.zeros((cout,), jnp.float32)
    return w, b, gamma, beta


def _ref_forward(x_nchw, params):
    """Pure-JAX reference mirroring the PyTorch module (training-mode BN)."""
    x = x_nchw.astype(jnp.float32)
    for (w, b, gamma, beta) in params:
        y = lax.conv_general_dilated(
            x, w, window_strides=(1, 1), padding="SAME",
            dimension_numbers=("NCHW", "HWIO", "NCHW"))
        y = y + b[None, :, None, None]
        mean = jnp.mean(y, axis=(0, 2, 3), keepdims=True)
        var = jnp.mean((y - mean) ** 2, axis=(0, 2, 3), keepdims=True)
        y = (y - mean) * lax.rsqrt(var + BN_EPS)
        y = y * gamma[None, :, None, None] + beta[None, :, None, None]
        x = jnp.where(y >= 0, y, LEAKY_SLOPE * y)
    return x


if __name__ == "__main__":
    in_channels, out_channels, times = 4, 8, 2
    N, H, W = 2, 16, 16

    key = jax.random.PRNGKey(0)
    keys = jax.random.split(key, times + 1)
    x = jax.random.normal(keys[0], (N, in_channels, H, W), jnp.float32)

    params = []
    cin = in_channels
    for i in range(times):
        params.append(init_block_params(keys[i + 1], cin, out_channels))
        cin = out_channels

    out = base_down_block(x, params)
    jax.block_until_ready(out)
    assert out.shape == (N, out_channels, H, W)

    ref = _ref_forward(x, params)
    max_err = float(jnp.max(jnp.abs(out - ref)))
    assert max_err < 1e-3, f"mismatch vs reference: max abs err = {max_err}"
    print("KERNEL_OK")
</pallas_src>

<mosaic_0001>
module attributes {stable_mosaic.version = 11 : i64} {
  func.func @_fused_kernel(%arg0: memref<32x64xf32, #tpu.memory_space<vmem>>, %arg1: memref<128x8xf32, #tpu.memory_space<vmem>>, %arg2: memref<8x128xf32, #tpu.memory_space<vmem>>, %arg3: memref<3x64x128xf32, #tpu.memory_space<vmem>>, %arg4: memref<1x8xf32, #tpu.memory_space<vmem>>, %arg5: memref<1x8xf32, #tpu.memory_space<vmem>>, %arg6: memref<3x128x128xf32, #tpu.memory_space<vmem>>, %arg7: memref<1x8xf32, #tpu.memory_space<vmem>>, %arg8: memref<1x8xf32, #tpu.memory_space<vmem>>, %arg9: memref<32x128xf32, #tpu.memory_space<vmem>>, %arg10: memref<36x64xf32, #tpu.memory_space<vmem>>, %arg11: memref<36x128xf32, #tpu.memory_space<vmem>>) attributes {dimension_semantics = [], scalar_prefetch = 0 : i64, scratch_operands = 2 : i64, tpu.core_type = #tpu.core_type<tc>} {
    %cst = arith.constant 0.000000e+00 : f32
    %0 = vector.broadcast %cst : f32 to vector<36x64xf32>
    %c0 = arith.constant 0 : index
    %c0_0 = arith.constant 0 : index
    %1 = vector.load %arg10[%c0, %c0_0] : memref<36x64xf32, #tpu.memory_space<vmem>>, vector<36x64xf32>
    tpu.vector_store %arg10[%c0, %c0_0], %0 {strides = array<i32>} : memref<36x64xf32, #tpu.memory_space<vmem>>, vector<36x64xf32>,
    %cst_1 = arith.constant 0.000000e+00 : f32
    %2 = vector.broadcast %cst_1 : f32 to vector<36x128xf32>
    %c0_2 = arith.constant 0 : index
    %c0_3 = arith.constant 0 : index
    %3 = vector.load %arg11[%c0_2, %c0_3] : memref<36x128xf32, #tpu.memory_space<vmem>>, vector<36x128xf32>
    tpu.vector_store %arg11[%c0_2, %c0_3], %2 {strides = array<i32>} : memref<36x128xf32, #tpu.memory_space<vmem>>, vector<36x128xf32>,
    %c0_4 = arith.constant 0 : index
    %c0_5 = arith.constant 0 : index
    %4 = vector.load %arg0[%c0_4, %c0_5] : memref<32x64xf32, #tpu.memory_space<vmem>>, vector<16x64xf32>
    %c1 = arith.constant 1 : index
    %c0_6 = arith.constant 0 : index
    %5 = vector.load %arg10[%c1, %c0_6] : memref<36x64xf32, #tpu.memory_space<vmem>>, vector<16x64xf32>
    tpu.vector_store %arg10[%c1, %c0_6], %4 {strides = array<i32>} : memref<36x64xf32, #tpu.memory_space<vmem>>, vector<16x64xf32>,
    %c16 = arith.constant 16 : index
    %c0_7 = arith.constant 0 : index
    %6 = vector.load %arg0[%c16, %c0_7] : memref<32x64xf32, #tpu.memory_space<vmem>>, vector<16x64xf32>
    %c19 = arith.constant 19 : index
    %c0_8 = arith.constant 0 : index
    %7 = vector.load %arg10[%c19, %c0_8] : memref<36x64xf32, #tpu.memory_space<vmem>>, vector<16x64xf32>
    tpu.vector_store %arg10[%c19, %c0_8], %6 {strides = array<i32>} : memref<36x64xf32, #tpu.memory_space<vmem>>, vector<16x64xf32>,
    %cst_9 = arith.constant 0.000000e+00 : f32
    %8 = vector.broadcast %cst_9 : f32 to vector<16x128xf32>
    %c0_10 = arith.constant 0 : index
    %c0_11 = arith.constant 0 : index
    %9 = vector.load %arg10[%c0_10, %c0_11] : memref<36x64xf32, #tpu.memory_space<vmem>>, vector<16x64xf32>
    %c0_12 = arith.constant 0 : index
    %c0_13 = arith.constant 0 : index
    %c0_14 = arith.constant 0 : index
    %10 = vector.load %arg3[%c0_12, %c0_13, %c0_14] : memref<3x64x128xf32, #tpu.memory_space<vmem>>, vector<1x64x128xf32>
    %11 = vector.shape_cast %10 : vector<1x64x128xf32> to vector<64x128xf32>
    %cst_15 = arith.constant dense<0.000000e+00> : vector<16x128xf32>
    %12 = tpu.matmul %9, %11, %cst_15 {dimension_numbers = #tpu.dot_dimension_numbers<[1], [0], [0], [1], [0, 0, 1, 1], [], []>} : vector<16x64xf32>, vector<64x128xf32>, vector<16x128xf32> -> vector<16x128xf32>
    %13 = arith.addf %8, %12 : vector<16x128xf32>
    %c1_16 = arith.constant 1 : index
    %c0_17 = arith.constant 0 : index
    %14 = vector.load %arg10[%c1_16, %c0_17] : memref<36x64xf32, #tpu.memory_space<vmem>>, vector<16x64xf32>
    %c1_18 = arith.constant 1 : index
    %c0_19 = arith.constant 0 : index
    %c0_20 = arith.constant 0 : index
    %15 = vector.load %arg3[%c1_18, %c0_19, %c0_20] : memref<3x64x128xf32, #tpu.memory_space<vmem>>, vector<1x64x128xf32>
    %16 = vector.shape_cast %15 : vector<1x64x128xf32> to vector<64x128xf32>
    %cst_21 = arith.constant dense<0.000000e+00> : vector<16x128xf32>
    %17 = tpu.matmul %14, %16, %cst_21 {dimension_numbers = #tpu.dot_dimension_numbers<[1], [0], [0], [1], [0, 0, 1, 1], [], []>} : vector<16x64xf32>, vector<64x128xf32>, vector<16x128xf32> -> vector<16x128xf32>
    %18 = arith.addf %13, %17 : vector<16x128xf32>
    %c2 = arith.constant 2 : index
    %c0_22 = arith.constant 0 : index
    %19 = vector.load %arg10[%c2, %c0_22] : memref<36x64xf32, #tpu.memory_space<vmem>>, vector<16x64xf32>
    %c2_23 = arith.constant 2 : index
    %c0_24 = arith.constant 0 : index
    %c0_25 = arith.constant 0 : index
    %20 = vector.load %arg3[%c2_23, %c0_24, %c0_25] : memref<3x64x128xf32, #tpu.memory_space<vmem>>, vector<1x64x128xf32>
    %21 = vector.shape_cast %20 : vector<1x64x128xf32> to vector<64x128xf32>
    %cst_26 = arith.constant dense<0.000000e+00> : vector<16x128xf32>
    %22 = tpu.matmul %19, %21, %cst_26 {dimension_numbers = #tpu.dot_dimension_numbers<[1], [0], [0], [1], [0, 0, 1, 1], [], []>} : vector<16x64xf32>, vector<64x128xf32>, vector<16x128xf32> -> vector<16x128xf32>
    %23 = arith.addf %18, %22 : vector<16x128xf32>
    %cst_27 = arith.constant 0.000000e+00 : f32
    %24 = vector.broadcast %cst_27 : f32 to vector<16x128xf32>
    %c18 = arith.constant 18 : index
    %c0_28 = arith.constant 0 : index
    %25 = vector.load %arg10[%c18, %c0_28] : memref<36x64xf32, #tpu.memory_space<vmem>>, vector<16x64xf32>
    %c0_29 = arith.constant 0 : index
    %c0_30 = arith.constant 0 : index
    %c0_31 = arith.constant 0 : index
    %26 = vector.load %arg3[%c0_29, %c0_30, %c0_31] : memref<3x64x128xf32, #tpu.memory_space<vmem>>, vector<1x64x128xf32>
    %27 = vector.shape_cast %26 : vector<1x64x128xf32> to vector<64x128xf32>
    %cst_32 = arith.constant dense<0.000000e+00> : vector<16x128xf32>
    %28 = tpu.matmul %25, %27, %cst_32 {dimension_numbers = #tpu.dot_dimension_numbers<[1], [0], [0], [1], [0, 0, 1, 1], [], []>} : vector<16x64xf32>, vector<64x128xf32>, vector<16x128xf32> -> vector<16x128xf32>
    %29 = arith.addf %24, %28 : vector<16x128xf32>
    %c19_33 = arith.constant 19 : index
    %c0_34 = arith.constant 0 : index
    %30 = vector.load %arg10[%c19_33, %c0_34] : memref<36x64xf32, #tpu.memory_space<vmem>>, vector<16x64xf32>
    %c1_35 = arith.constant 1 : index
    %c0_36 = arith.constant 0 : index
    %c0_37 = arith.constant 0 : index
    %31 = vector.load %arg3[%c1_35, %c0_36, %c0_37] : memref<3x64x128xf32, #tpu.memory_space<vmem>>, vector<1x64x128xf32>
    %32 = vector.shape_cast %31 : vector<1x64x128xf32> to vector<64x128xf32>
    %cst_38 = arith.constant dense<0.000000e+00> : vector<16x128xf32>
    %33 = tpu.matmul %30, %32, %cst_38 {dimension_numbers = #tpu.dot_dimension_numbers<[1], [0], [0], [1], [0, 0, 1, 1], [], []>} : vector<16x64xf32>, vector<64x128xf32>, vector<16x128xf32> -> vector<16x128xf32>
    %34 = arith.addf %29, %33 : vector<16x128xf32>
    %c20 = arith.constant 20 : index
    %c0_39 = arith.constant 0 : index
    %35 = vector.load %arg10[%c20, %c0_39] : memref<36x64xf32, #tpu.memory_space<vmem>>, vector<16x64xf32>
    %c2_40 = arith.constant 2 : index
    %c0_41 = arith.constant 0 : index
    %c0_42 = arith.constant 0 : index
    %36 = vector.load %arg3[%c2_40, %c0_41, %c0_42] : memref<3x64x128xf32, #tpu.memory_space<vmem>>, vector<1x64x128xf32>
    %37 = vector.shape_cast %36 : vector<1x64x128xf32> to vector<64x128xf32>
    %cst_43 = arith.constant dense<0.000000e+00> : vector<16x128xf32>
    %38 = tpu.matmul %35, %37, %cst_43 {dimension_numbers = #tpu.dot_dimension_numbers<[1], [0], [0], [1], [0, 0, 1, 1], [], []>} : vector<16x64xf32>, vector<64x128xf32>, vector<16x128xf32> -> vector<16x128xf32>
    %39 = arith.addf %34, %38 : vector<16x128xf32>
    %cst_44 = arith.constant 0.000000e+00 : f32
    %40 = vector.broadcast %cst_44 : f32 to vector<1x128xf32>
    %cst_45 = arith.constant 0.000000e+00 : f32
    %41 = vector.broadcast %cst_45 : f32 to vector<1x128xf32>
    %cst_46 = arith.constant dense<0.000000e+00> : vector<128xf32>
    %42 = vector.multi_reduction <add>, %23, %cst_46 [0] : vector<16x128xf32> to vector<128xf32>
    %43 = vector.shape_cast %42 : vector<128xf32> to vector<1x128xf32>
    %44 = arith.addf %40, %43 : vector<1x128xf32>
    %45 = arith.mulf %23, %23 : vector<16x128xf32>
    %cst_47 = arith.constant dense<0.000000e+00> : vector<128xf32>
    %46 = vector.multi_reduction <add>, %45, %cst_47 [0] : vector<16x128xf32> to vector<128xf32>
    %47 = vector.shape_cast %46 : vector<128xf32> to vector<1x128xf32>
    %48 = arith.addf %41, %47 : vector<1x128xf32>
    %cst_48 = arith.constant dense<0.000000e+00> : vector<128xf32>
    %49 = vector.multi_reduction <add>, %39, %cst_48 [0] : vector<16x128xf32> to vector<128xf32>
    %50 = vector.shape_cast %49 : vector<128xf32> to vector<1x128xf32>
    %51 = arith.addf %44, %50 : vector<1x128xf32>
    %52 = arith.mulf %39, %39 : vector<16x128xf32>
    %cst_49 = arith.constant dense<0.000000e+00> : vector<128xf32>
    %53 = vector.multi_reduction <add>, %52, %cst_49 [0] : vector<16x128xf32> to vector<128xf32>
    %54 = vector.shape_cast %53 : vector<128xf32> to vector<1x128xf32>
    %55 = arith.addf %48, %54 : vector<1x128xf32>
    %c0_50 = arith.constant 0 : index
    %c0_51 = arith.constant 0 : index
    %56 = vector.load %arg1[%c0_50, %c0_51] : memref<128x8xf32, #tpu.memory_space<vmem>>, vector<128x8xf32>
    %cst_52 = arith.constant dense<0.000000e+00> : vector<1x8xf32>
    %57 = tpu.matmul %51, %56, %cst_52 {dimension_numbers = #tpu.dot_dimension_numbers<[1], [0], [0], [1], [0, 0, 1, 1], [], []>} : vector<1x128xf32>, vector<128x8xf32>, vector<1x8xf32> -> vector<1x8xf32>
    %c0_53 = arith.constant 0 : index
    %c0_54 = arith.constant 0 : index
    %58 = vector.load %arg1[%c0_53, %c0_54] : memref<128x8xf32, #tpu.memory_space<vmem>>, vector<128x8xf32>
    %cst_55 = arith.constant dense<0.000000e+00> : vector<1x8xf32>
    %59 = tpu.matmul %55, %58, %cst_55 {dimension_numbers = #tpu.dot_dimension_numbers<[1], [0], [0], [1], [0, 0, 1, 1], [], []>} : vector<1x128xf32>, vector<128x8xf32>, vector<1x8xf32> -> vector<1x8xf32>
    %cst_56 = arith.constant 5.120000e+02 : f32
    %60 = vector.broadcast %cst_56 : f32 to vector<1x8xf32>
    %61 = arith.divf %57, %60 : vector<1x8xf32>
    %cst_57 = arith.constant 5.120000e+02 : f32
    %62 = vector.broadcast %cst_57 : f32 to vector<1x8xf32>
    %63 = arith.divf %59, %62 : vector<1x8xf32>
    %64 = arith.mulf %61, %61 : vector<1x8xf32>
    %65 = arith.subf %63, %64 : vector<1x8xf32>
    %c0_58 = arith.constant 0 : index
    %c0_59 = arith.constant 0 : index
    %66 = vector.load %arg4[%c0_58, %c0_59] : memref<1x8xf32, #tpu.memory_space<vmem>>, vector<1x8xf32>
    %cst_60 = arith.constant 9.99999974E-6 : f32
    %67 = vector.broadcast %cst_60 : f32 to vector<1x8xf32>
    %68 = arith.addf %65, %67 : vector<1x8xf32>
    %69 = math.rsqrt %68 : vector<1x8xf32>
    %70 = arith.mulf %66, %69 : vector<1x8xf32>
    %c0_61 = arith.constant 0 : index
    %c0_62 = arith.constant 0 : index
    %71 = vector.load %arg5[%c0_61, %c0_62] : memref<1x8xf32, #tpu.memory_space<vmem>>, vector<1x8xf32>
    %72 = arith.mulf %61, %70 : vector<1x8xf32>
    %73 = arith.subf %71, %72 : vector<1x8xf32>
    %c0_63 = arith.constant 0 : index
    %c0_64 = arith.constant 0 : index
    %74 = vector.load %arg2[%c0_63, %c0_64] : memref<8x128xf32, #tpu.memory_space<vmem>>, vector<8x128xf32>
    %cst_65 = arith.constant dense<0.000000e+00> : vector<1x128xf32>
    %75 = tpu.matmul %70, %74, %cst_65 {dimension_numbers = #tpu.dot_dimension_numbers<[1], [0], [0], [1], [0, 0, 1, 1], [], []>} : vector<1x8xf32>, vector<8x128xf32>, vector<1x128xf32> -> vector<1x128xf32>
    %c0_66 = arith.constant 0 : index
    %c0_67 = arith.constant 0 : index
    %76 = vector.load %arg2[%c0_66, %c0_67] : memref<8x128xf32, #tpu.memory_space<vmem>>, vector<8x128xf32>
    %cst_68 = arith.constant dense<0.000000e+00> : vector<1x128xf32>
    %77 = tpu.matmul %73, %76, %cst_68 {dimension_numbers = #tpu.dot_dimension_numbers<[1], [0], [0], [1], [0, 0, 1, 1], [], []>} : vector<1x8xf32>, vector<8x128xf32>, vector<1x128xf32> -> vector<1x128xf32>
    %78 = vector.broadcast %75 : vector<1x128xf32> to vector<16x128xf32>
    %79 = arith.mulf %23, %78 : vector<16x128xf32>
    %80 = vector.broadcast %77 : vector<1x128xf32> to vector<16x128xf32>
    %81 = arith.addf %79, %80 : vector<16x128xf32>
    %cst_69 = arith.constant 0.000000e+00 : f32
    %82 = vector.broadcast %cst_69 : f32 to vector<16x128xf32>
    %83 = arith.cmpf oge, %81, %82 : vector<16x128xf32>
    %cst_70 = arith.constant 0.00999999977 : f32
    %84 = vector.broadcast %cst_70 : f32 to vector<16x128xf32>
    %85 = arith.mulf %84, %81 : vector<16x128xf32>
    %86 = arith.select %83, %81, %85 : vector<16x128xi1>, vector<16x128xf32>
    %c1_71 = arith.constant 1 : index
    %c0_72 = arith.constant 0 : index
    %87 = vector.load %arg11[%c1_71, %c0_72] : memref<36x128xf32, #tpu.memory_space<vmem>>, vector<16x128xf32>
    tpu.vector_store %arg11[%c1_71, %c0_72], %86 {strides = array<i32>} : memref<36x128xf32, #tpu.memory_space<vmem>>, vector<16x128xf32>,
    %88 = vector.broadcast %75 : vector<1x128xf32> to vector<16x128xf32>
    %89 = arith.mulf %39, %88 : vector<16x128xf32>
    %90 = vector.broadcast %77 : vector<1x128xf32> to vector<16x128xf32>
    %91 = arith.addf %89, %90 : vector<16x128xf32>
    %cst_73 = arith.constant 0.000000e+00 : f32
    %92 = vector.broadcast %cst_73 : f32 to vector<16x128xf32>
    %93 = arith.cmpf oge, %91, %92 : vector<16x128xf32>
    %cst_74 = arith.constant 0.00999999977 : f32
    %94 = vector.broadcast %cst_74 : f32 to vector<16x128xf32>
    %95 = arith.mulf %94, %91 : vector<16x128xf32>
    %96 = arith.select %93, %91, %95 : vector<16x128xi1>, vector<16x128xf32>
    %c19_75 = arith.constant 19 : index
    %c0_76 = arith.constant 0 : index
    %97 = vector.load %arg11[%c19_75, %c0_76] : memref<36x128xf32, #tpu.memory_space<vmem>>, vector<16x128xf32>
    tpu.vector_store %arg11[%c19_75, %c0_76], %96 {strides = array<i32>} : memref<36x128xf32, #tpu.memory_space<vmem>>, vector<16x128xf32>,
    %cst_77 = arith.constant 0.000000e+00 : f32
    %98 = vector.broadcast %cst_77 : f32 to vector<16x128xf32>
    %c0_78 = arith.constant 0 : index
    %c0_79 = arith.constant 0 : index
    %99 = vector.load %arg11[%c0_78, %c0_79] : memref<36x128xf32, #tpu.memory_space<vmem>>, vector<16x128xf32>
    %c0_80 = arith.constant 0 : index
    %c0_81 = arith.constant 0 : index
    %c0_82 = arith.constant 0 : index
    %100 = vector.load %arg6[%c0_80, %c0_81, %c0_82] : memref<3x128x128xf32, #tpu.memory_space<vmem>>, vector<1x128x128xf32>
    %101 = vector.shape_cast %100 : vector<1x128x128xf32> to vector<128x128xf32>
    %cst_83 = arith.constant dense<0.000000e+00> : vector<16x128xf32>
    %102 = tpu.matmul %99, %101, %cst_83 {dimension_numbers = #tpu.dot_dimension_numbers<[1], [0], [0], [1], [0, 0, 1, 1], [], []>} : vector<16x128xf32>, vector<128x128xf32>, vector<16x128xf32> -> vector<16x128xf32>
    %103 = arith.addf %98, %102 : vector<16x128xf32>
    %c1_84 = arith.constant 1 : index
    %c0_85 = arith.constant 0 : index
    %104 = vector.load %arg11[%c1_84, %c0_85] : memref<36x128xf32, #tpu.memory_space<vmem>>, vector<16x128xf32>
    %c1_86 = arith.constant 1 : index
    %c0_87 = arith.constant 0 : index
    %c0_88 = arith.constant 0 : index
    %105 = vector.load %arg6[%c1_86, %c0_87, %c0_88] : memref<3x128x128xf32, #tpu.memory_space<vmem>>, vector<1x128x128xf32>
    %106 = vector.shape_cast %105 : vector<1x128x128xf32> to vector<128x128xf32>
    %cst_89 = arith.constant dense<0.000000e+00> : vector<16x128xf32>
    %107 = tpu.matmul %104, %106, %cst_89 {dimension_numbers = #tpu.dot_dimension_numbers<[1], [0], [0], [1], [0, 0, 1, 1], [], []>} : vector<16x128xf32>, vector<128x128xf32>, vector<16x128xf32> -> vector<16x128xf32>
    %108 = arith.addf %103, %107 : vector<16x128xf32>
    %c2_90 = arith.constant 2 : index
    %c0_91 = arith.constant 0 : index
    %109 = vector.load %arg11[%c2_90, %c0_91] : memref<36x128xf32, #tpu.memory_space<vmem>>, vector<16x128xf32>
    %c2_92 = arith.constant 2 : index
    %c0_93 = arith.constant 0 : index
    %c0_94 = arith.constant 0 : index
    %110 = vector.load %arg6[%c2_92, %c0_93, %c0_94] : memref<3x128x128xf32, #tpu.memory_space<vmem>>, vector<1x128x128xf32>
    %111 = vector.shape_cast %110 : vector<1x128x128xf32> to vector<128x128xf32>
    %cst_95 = arith.constant dense<0.000000e+00> : vector<16x128xf32>
    %112 = tpu.matmul %109, %111, %cst_95 {dimension_numbers = #tpu.dot_dimension_numbers<[1], [0], [0], [1], [0, 0, 1, 1], [], []>} : vector<16x128xf32>, vector<128x128xf32>, vector<16x128xf32> -> vector<16x128xf32>
    %113 = arith.addf %108, %112 : vector<16x128xf32>
    %cst_96 = arith.constant 0.000000e+00 : f32
    %114 = vector.broadcast %cst_96 : f32 to vector<16x128xf32>
    %c18_97 = arith.constant 18 : index
    %c0_98 = arith.constant 0 : index
    %115 = vector.load %arg11[%c18_97, %c0_98] : memref<36x128xf32, #tpu.memory_space<vmem>>, vector<16x128xf32>
    %c0_99 = arith.constant 0 : index
    %c0_100 = arith.constant 0 : index
    %c0_101 = arith.constant 0 : index
    %116 = vector.load %arg6[%c0_99, %c0_100, %c0_101] : memref<3x128x128xf32, #tpu.memory_space<vmem>>, vector<1x128x128xf32>
    %117 = vector.shape_cast %116 : vector<1x128x128xf32> to vector<128x128xf32>
    %cst_102 = arith.constant dense<0.000000e+00> : vector<16x128xf32>
    %118 = tpu.matmul %115, %117, %cst_102 {dimension_numbers = #tpu.dot_dimension_numbers<[1], [0], [0], [1], [0, 0, 1, 1], [], []>} : vector<16x128xf32>, vector<128x128xf32>, vector<16x128xf32> -> vector<16x128xf32>
    %119 = arith.addf %114, %118 : vector<16x128xf32>
    %c19_103 = arith.constant 19 : index
    %c0_104 = arith.constant 0 : index
    %120 = vector.load %arg11[%c19_103, %c0_104] : memref<36x128xf32, #tpu.memory_space<vmem>>, vector<16x128xf32>
    %c1_105 = arith.constant 1 : index
    %c0_106 = arith.constant 0 : index
    %c0_107 = arith.constant 0 : index
    %121 = vector.load %arg6[%c1_105, %c0_106, %c0_107] : memref<3x128x128xf32, #tpu.memory_space<vmem>>, vector<1x128x128xf32>
    %122 = vector.shape_cast %121 : vector<1x128x128xf32> to vector<128x128xf32>
    %cst_108 = arith.constant dense<0.000000e+00> : vector<16x128xf32>
    %123 = tpu.matmul %120, %122, %cst_108 {dimension_numbers = #tpu.dot_dimension_numbers<[1], [0], [0], [1], [0, 0, 1, 1], [], []>} : vector<16x128xf32>, vector<128x128xf32>, vector<16x128xf32> -> vector<16x128xf32>
    %124 = arith.addf %119, %123 : vector<16x128xf32>
    %c20_109 = arith.constant 20 : index
    %c0_110 = arith.constant 0 : index
    %125 = vector.load %arg11[%c20_109, %c0_110] : memref<36x128xf32, #tpu.memory_space<vmem>>, vector<16x128xf32>
    %c2_111 = arith.constant 2 : index
    %c0_112 = arith.constant 0 : index
    %c0_113 = arith.constant 0 : index
    %126 = vector.load %arg6[%c2_111, %c0_112, %c0_113] : memref<3x128x128xf32, #tpu.memory_space<vmem>>, vector<1x128x128xf32>
    %127 = vector.shape_cast %126 : vector<1x128x128xf32> to vector<128x128xf32>
    %cst_114 = arith.constant dense<0.000000e+00> : vector<16x128xf32>
    %128 = tpu.matmul %125, %127, %cst_114 {dimension_numbers = #tpu.dot_dimension_numbers<[1], [0], [0], [1], [0, 0, 1, 1], [], []>} : vector<16x128xf32>, vector<128x128xf32>, vector<16x128xf32> -> vector<16x128xf32>
    %129 = arith.addf %124, %128 : vector<16x128xf32>
    %cst_115 = arith.constant 0.000000e+00 : f32
    %130 = vector.broadcast %cst_115 : f32 to vector<1x128xf32>
    %cst_116 = arith.constant 0.000000e+00 : f32
    %131 = vector.broadcast %cst_116 : f32 to vector<1x128xf32>
    %cst_117 = arith.constant dense<0.000000e+00> : vector<128xf32>
    %132 = vector.multi_reduction <add>, %113, %cst_117 [0] : vector<16x128xf32> to vector<128xf32>
    %133 = vector.shape_cast %132 : vector<128xf32> to vector<1x128xf32>
    %134 = arith.addf %130, %133 : vector<1x128xf32>
    %135 = arith.mulf %113, %113 : vector<16x128xf32>
    %cst_118 = arith.constant dense<0.000000e+00> : vector<128xf32>
    %136 = vector.multi_reduction <add>, %135, %cst_118 [0] : vector<16x128xf32> to vector<128xf32>
    %137 = vector.shape_cast %136 : vector<128xf32> to vector<1x128xf32>
    %138 = arith.addf %131, %137 : vector<1x128xf32>
    %cst_119 = arith.constant dense<0.000000e+00> : vector<128xf32>
    %139 = vector.multi_reduction <add>, %129, %cst_119 [0] : vector<16x128xf32> to vector<128xf32>
    %140 = vector.shape_cast %139 : vector<128xf32> to vector<1x128xf32>
    %141 = arith.addf %134, %140 : vector<1x128xf32>
    %142 = arith.mulf %129, %129 : vector<16x128xf32>
    %cst_120 = arith.constant dense<0.000000e+00> : vector<128xf32>
    %143 = vector.multi_reduction <add>, %142, %cst_120 [0] : vector<16x128xf32> to vector<128xf32>
    %144 = vector.shape_cast %143 : vector<128xf32> to vector<1x128xf32>
    %145 = arith.addf %138, %144 : vector<1x128xf32>
    %c0_121 = arith.constant 0 : index
    %c0_122 = arith.constant 0 : index
    %146 = vector.load %arg1[%c0_121, %c0_122] : memref<128x8xf32, #tpu.memory_space<vmem>>, vector<128x8xf32>
    %cst_123 = arith.constant dense<0.000000e+00> : vector<1x8xf32>
    %147 = tpu.matmul %141, %146, %cst_123 {dimension_numbers = #tpu.dot_dimension_numbers<[1], [0], [0], [1], [0, 0, 1, 1], [], []>} : vector<1x128xf32>, vector<128x8xf32>, vector<1x8xf32> -> vector<1x8xf32>
    %c0_124 = arith.constant 0 : index
    %c0_125 = arith.constant 0 : index
    %148 = vector.load %arg1[%c0_124, %c0_125] : memref<128x8xf32, #tpu.memory_space<vmem>>, vector<128x8xf32>
    %cst_126 = arith.constant dense<0.000000e+00> : vector<1x8xf32>
    %149 = tpu.matmul %145, %148, %cst_126 {dimension_numbers = #tpu.dot_dimension_numbers<[1], [0], [0], [1], [0, 0, 1, 1], [], []>} : vector<1x128xf32>, vector<128x8xf32>, vector<1x8xf32> -> vector<1x8xf32>
    %cst_127 = arith.constant 5.120000e+02 : f32
    %150 = vector.broadcast %cst_127 : f32 to vector<1x8xf32>
    %151 = arith.divf %147, %150 : vector<1x8xf32>
    %cst_128 = arith.constant 5.120000e+02 : f32
    %152 = vector.broadcast %cst_128 : f32 to vector<1x8xf32>
    %153 = arith.divf %149, %152 : vector<1x8xf32>
    %154 = arith.mulf %151, %151 : vector<1x8xf32>
    %155 = arith.subf %153, %154 : vector<1x8xf32>
    %c0_129 = arith.constant 0 : index
    %c0_130 = arith.constant 0 : index
    %156 = vector.load %arg7[%c0_129, %c0_130] : memref<1x8xf32, #tpu.memory_space<vmem>>, vector<1x8xf32>
    %cst_131 = arith.constant 9.99999974E-6 : f32
    %157 = vector.broadcast %cst_131 : f32 to vector<1x8xf32>
    %158 = arith.addf %155, %157 : vector<1x8xf32>
    %159 = math.rsqrt %158 : vector<1x8xf32>
    %160 = arith.mulf %156, %159 : vector<1x8xf32>
    %c0_132 = arith.constant 0 : index
    %c0_133 = arith.constant 0 : index
    %161 = vector.load %arg8[%c0_132, %c0_133] : memref<1x8xf32, #tpu.memory_space<vmem>>, vector<1x8xf32>
    %162 = arith.mulf %151, %160 : vector<1x8xf32>
    %163 = arith.subf %161, %162 : vector<1x8xf32>
    %c0_134 = arith.constant 0 : index
    %c0_135 = arith.constant 0 : index
    %164 = vector.load %arg2[%c0_134, %c0_135] : memref<8x128xf32, #tpu.memory_space<vmem>>, vector<8x128xf32>
    %cst_136 = arith.constant dense<0.000000e+00> : vector<1x128xf32>
    %165 = tpu.matmul %160, %164, %cst_136 {dimension_numbers = #tpu.dot_dimension_numbers<[1], [0], [0], [1], [0, 0, 1, 1], [], []>} : vector<1x8xf32>, vector<8x128xf32>, vector<1x128xf32> -> vector<1x128xf32>
    %c0_137 = arith.constant 0 : index
    %c0_138 = arith.constant 0 : index
    %166 = vector.load %arg2[%c0_137, %c0_138] : memref<8x128xf32, #tpu.memory_space<vmem>>, vector<8x128xf32>
    %cst_139 = arith.constant dense<0.000000e+00> : vector<1x128xf32>
    %167 = tpu.matmul %163, %166, %cst_139 {dimension_numbers = #tpu.dot_dimension_numbers<[1], [0], [0], [1], [0, 0, 1, 1], [], []>} : vector<1x8xf32>, vector<8x128xf32>, vector<1x128xf32> -> vector<1x128xf32>
    %168 = vector.broadcast %165 : vector<1x128xf32> to vector<16x128xf32>
    %169 = arith.mulf %113, %168 : vector<16x128xf32>
    %170 = vector.broadcast %167 : vector<1x128xf32> to vector<16x128xf32>
    %171 = arith.addf %169, %170 : vector<16x128xf32>
    %cst_140 = arith.constant 0.000000e+00 : f32
    %172 = vector.broadcast %cst_140 : f32 to vector<16x128xf32>
    %173 = arith.cmpf oge, %171, %172 : vector<16x128xf32>
    %cst_141 = arith.constant 0.00999999977 : f32
    %174 = vector.broadcast %cst_141 : f32 to vector<16x128xf32>
    %175 = arith.mulf %174, %171 : vector<16x128xf32>
    %176 = arith.select %173, %171, %175 : vector<16x128xi1>, vector<16x128xf32>
    %c0_142 = arith.constant 0 : index
    %c0_143 = arith.constant 0 : index
    %177 = vector.load %arg9[%c0_142, %c0_143] : memref<32x128xf32, #tpu.memory_space<vmem>>, vector<16x128xf32>
    tpu.vector_store %arg9[%c0_142, %c0_143], %176 {strides = array<i32>} : memref<32x128xf32, #tpu.memory_space<vmem>>, vector<16x128xf32>,
    %178 = vector.broadcast %165 : vector<1x128xf32> to vector<16x128xf32>
    %179 = arith.mulf %129, %178 : vector<16x128xf32>
    %180 = vector.broadcast %167 : vector<1x128xf32> to vector<16x128xf32>
    %181 = arith.addf %179, %180 : vector<16x128xf32>
    %cst_144 = arith.constant 0.000000e+00 : f32
    %182 = vector.broadcast %cst_144 : f32 to vector<16x128xf32>
    %183 = arith.cmpf oge, %181, %182 : vector<16x128xf32>
    %cst_145 = arith.constant 0.00999999977 : f32
    %184 = vector.broadcast %cst_145 : f32 to vector<16x128xf32>
    %185 = arith.mulf %184, %181 : vector<16x128xf32>
    %186 = arith.select %183, %181, %185 : vector<16x128xi1>, vector<16x128xf32>
    %c16_146 = arith.constant 16 : index
    %c0_147 = arith.constant 0 : index
    %187 = vector.load %arg9[%c16_146, %c0_147] : memref<32x128xf32, #tpu.memory_space<vmem>>, vector<16x128xf32>
    tpu.vector_store %arg9[%c16_146, %c0_147], %186 {strides = array<i32>} : memref<32x128xf32, #tpu.memory_space<vmem>>, vector<16x128xf32>,
    return
  }
}

</mosaic_0001>

<llo_original>
// kernel: tpu_custom_call.1
$region0: #{tpu_custom_call.1}
  #allocation0 [shape = 'u32[]', space=smem, size = 0x4, offset = 0x4, fixed_abs, tag = 'smem constant byte address 0x4 - core index']
  #allocation1 [shape = 'u32[144,128]{1,0:T(1,128)}', space=vmem, size = 0x12000, scoped, tag = 'internal scratch']
  #allocation2 [shape = 'f32[36,64]{1,0:T(8,128)}', space=vmem, size = 0x5000, scoped, tag = 'scratch operand']
  #allocation3 [shape = 'f32[36,128]{1,0:T(8,128)}', space=vmem, size = 0x5000, scoped, tag = 'scratch operand']
  %s0 = inlined_call_operand.vmem [shape: f32[32,64], index: 0, kind: input, shape index: {}]
  %s1 = inlined_call_operand.vmem [shape: f32[128,8], index: 1, kind: input, shape index: {}]
  %s2 = inlined_call_operand.vmem [shape: f32[8,128], index: 2, kind: input, shape index: {}]
  %s3 = inlined_call_operand.hbm [shape: f32[3,64,128], index: 3, kind: input, shape index: {}]
  %s4 = inlined_call_operand.vmem [shape: f32[1,8], index: 4, kind: input, shape index: {}]
  %s5 = inlined_call_operand.vmem [shape: f32[1,8], index: 5, kind: input, shape index: {}]
  %s6 = inlined_call_operand.hbm [shape: f32[3,128,128], index: 6, kind: input, shape index: {}]
  %s7 = inlined_call_operand.vmem [shape: f32[1,8], index: 7, kind: input, shape index: {}]
  %s8 = inlined_call_operand.vmem [shape: f32[1,8], index: 8, kind: input, shape index: {}]
  %s9 = inlined_call_operand.hbm [shape: f32[32,128], index: 9, kind: output, shape index: {}]
  %s10 = sld [smem:[#allocation0]]
  $region54: #{tpu_custom_call.1} parent=0
    _
  %s12 = ssub.s32 1, %s10
  %s13 = scalar_select 0, %s12, %s10
  $region1: #{tpu_custom_call.1} parent=0
    #allocation4 [shape = 'u8[98304]{0}', space=vmem, size = 0x18000, scoped, tag = 'input window, operand 3, single buffered']
    #allocation5 [shape = 's32[1]{0}', space=sflag, size = 0x4, scoped, tag = 'scoped memory for tpu_custom_call.1']
    #allocation6 [shape = 's32[1]{0}', space=sflag, size = 0x4, scoped, tag = 'scoped memory for tpu_custom_call.1']
    #allocation7 [shape = 'u8[196608]{0}', space=vmem, size = 0x30000, scoped, tag = 'input window, operand 6, single buffered']
    #allocation8 [shape = 's32[1]{0}', space=sflag, size = 0x4, scoped, tag = 'scoped memory for tpu_custom_call.1']
    #allocation9 [shape = 'u8[16384]{0}', space=vmem, size = 0x4000, scoped, tag = 'output window, operand 0, single buffered']
    %14 = vsyncpa [#allocation5], 0
    %15 = vsyncpa [#allocation8], 0
    %16 = vsyncpa [#allocation6], 0
    // Predicated region
    $region2: #{tpu_custom_call.1} parent=1 // pred_check
      _
    $region3: #{tpu_custom_call.1} parent=1 // pred_check_branch
      %18 = sbr.rel (0) target = $region5
    $region4: #{tpu_custom_call.1} parent=1 // pred_region
      _
    $region5: #{tpu_custom_call.1} parent=1 // pred_fallthru
      _
    // Predicated region
    $region6: #{tpu_custom_call.1} parent=1 // pred_check
      _
    $region7: #{tpu_custom_call.1} parent=1 // pred_check_branch
      %20 = sbr.rel (0) target = $region9
    $region8: #{tpu_custom_call.1} parent=1 // pred_region
      _
    $region9: #{tpu_custom_call.1} parent=1 // pred_fallthru
      _
    // Predicated region
    $region10: #{tpu_custom_call.1} parent=1 // pred_check
      _
    $region11: #{tpu_custom_call.1} parent=1 // pred_check_branch
      %22 = sbr.rel (0) target = $region13
    $region12: #{tpu_custom_call.1} parent=1 // pred_region
      _
    $region13: #{tpu_custom_call.1} parent=1 // pred_fallthru
      _
    // Predicated region
    $region14: #{tpu_custom_call.1} parent=1 // pred_check
      _
    $region15: #{tpu_custom_call.1} parent=1 // pred_check_branch
      %24 = sbr.rel (0) target = $region17
    $region16: #{tpu_custom_call.1} parent=1 // pred_region
      %s26 = ssub.s32 3072, 3072
      %27 = vsyncadd [#allocation5], %s26
      %s28 = sshll.u32 [#allocation4], 4
      %s29 = int_to_ptr.vmem [resolvable:$true] %s28
      %34 = dma.hbm_to_vmem [thread:$0]  %s3, 3072, %s29, [#allocation5], 128, 128, 8
    $region17: #{tpu_custom_call.1} parent=1 // pred_fallthru
      _
    // Predicated region
    $region18: #{tpu_custom_call.1} parent=1 // pred_check
      _
    $region19: #{tpu_custom_call.1} parent=1 // pred_check_branch
      %36 = sbr.rel (0) target = $region21
    $region20: #{tpu_custom_call.1} parent=1 // pred_region
      _
    $region21: #{tpu_custom_call.1} parent=1 // pred_fallthru
      _
    // Predicated region
    $region22: #{tpu_custom_call.1} parent=1 // pred_check
      _
    $region23: #{tpu_custom_call.1} parent=1 // pred_check_branch
      %38 = sbr.rel (0) target = $region25
    $region24: #{tpu_custom_call.1} parent=1 // pred_region
      _
    $region25: #{tpu_custom_call.1} parent=1 // pred_fallthru
      _
    // Predicated region
    $region26: #{tpu_custom_call.1} parent=1 // pred_check
      _
    $region27: #{tpu_custom_call.1} parent=1 // pred_check_branch
      %40 = sbr.rel (0) target = $region29
    $region28: #{tpu_custom_call.1} parent=1 // pred_region
      %s42 = ssub.s32 6144, 6144
      %43 = vsyncadd [#allocation8], %s42
      %s44 = sshll.u32 [#allocation7], 4
      %s45 = int_to_ptr.vmem [resolvable:$true] %s44
      %50 = dma.hbm_to_vmem [thread:$0]  %s6, 6144, %s45, [#allocation8], 128, 128, 8
    $region29: #{tpu_custom_call.1} parent=1 // pred_fallthru
      _
    // Predicated region
    $region30: #{tpu_custom_call.1} parent=1 // pred_check
      _
    $region31: #{tpu_custom_call.1} parent=1 // pred_check_branch
      %52 = sbr.rel (0) target = $region33
    $region32: #{tpu_custom_call.1} parent=1 // pred_region
      _
    $region33: #{tpu_custom_call.1} parent=1 // pred_fallthru
      _
    // Predicated region
    $region34: #{tpu_custom_call.1} parent=1 // pred_check
      _
    $region35: #{tpu_custom_call.1} parent=1 // pred_check_branch
      %54 = sbr.rel (0) target = $region37
    $region36: #{tpu_custom_call.1} parent=1 // pred_region
      _
    $region37: #{tpu_custom_call.1} parent=1 // pred_fallthru
      _
    // Predicated region
    $region38: #{tpu_custom_call.1} parent=1 // pred_check
      _
    $region39: #{tpu_custom_call.1} parent=1 // pred_check_branch
      %56 = sbr.rel (0) target = $region41
    $region40: #{tpu_custom_call.1} parent=1 // pred_region
      %57 = dma.done [#allocation5], 3072
    $region41: #{tpu_custom_call.1} parent=1 // pred_fallthru
      _
    // Predicated region
    $region42: #{tpu_custom_call.1} parent=1 // pred_check
      _
    $region43: #{tpu_custom_call.1} parent=1 // pred_check_branch
      %59 = sbr.rel (0) target = $region45
    $region44: #{tpu_custom_call.1} parent=1 // pred_region
      %60 = dma.done [#allocation8], 6144
    $region45: #{tpu_custom_call.1} parent=1 // pred_fallthru
      _
    %vm61 = vcmask 523264
    %62 = vst.msk [vmem:[#allocation2] sm:$0xff] %vm61, 0.0
    %63 = vst.msk [vmem:[#allocation2 + $0x8] sm:$0xff] %vm61, 0.0
    %64 = vst.msk [vmem:[#allocation2 + $0x10] sm:$0xff] %vm61, 0.0
    %65 = vst.msk [vmem:[#allocation2 + $0x18] sm:$0xff] %vm61, 0.0
    %vm66 = vcmask 519168
    %67 = vst.msk [vmem:[#allocation2 + $0x20] sm:$0xf] %vm66, 0.0
    %68 = vst [vmem:[#allocation3] sm:$0xff] 0.0
    %69 = vst [vmem:[#allocation3 + $0x8] sm:$0xff] 0.0
    %70 = vst [vmem:[#allocation3 + $0x10] sm:$0xff] 0.0
    %71 = vst [vmem:[#allocation3 + $0x18] sm:$0xff] 0.0
    %72 = vst [vmem:[#allocation3 + $0x20] sm:$0xf] 0.0
    %v73 = vld [vmem:[%s0] sm:$0xff]
    %v74 = vld [vmem:[%s0 + $0x8] sm:$0xff]
    %75 = vst.msk [vmem:[#allocation2 + $0x1] sm:$0xff] %vm61, %v73
    %76 = vst.msk [vmem:[#allocation2 + $0x9] sm:$0xff] %vm61, %v74
    %v77 = vld [vmem:[%s0 + $0x10] sm:$0xff]
    %v78 = vld [vmem:[%s0 + $0x18] sm:$0xff]
    %79 = vst.msk [vmem:[#allocation2 + $0x13] sm:$0xff] %vm61, %v77
    %80 = vst.msk [vmem:[#allocation2 + $0x1b] sm:$0xff] %vm61, %v78
    %v81 = vld [vmem:[#allocation2] sm:$0xff]
    %v82 = vld [vmem:[#allocation2 + $0x8] sm:$0xff]
    %v83 = vld [vmem:[#allocation4] sm:$0xff]
    %v84 = vld [vmem:[#allocation4 + $0x8] sm:$0xff]
    %v85 = vld [vmem:[#allocation4 + $0x10] sm:$0xff]
    %v86 = vld [vmem:[#allocation4 + $0x18] sm:$0xff]
    %v87 = vld [vmem:[#allocation4 + $0x20] sm:$0xff]
    %v88 = vld [vmem:[#allocation4 + $0x28] sm:$0xff]
    %v89 = vld [vmem:[#allocation4 + $0x30] sm:$0xff]
    %v90 = vld [vmem:[#allocation4 + $0x38] sm:$0xff]
    %v91 = vld [vmem:[#allocation2 + $0x1] sm:$0xff]
    %v92 = vld [vmem:[#allocation2 + $0x9] sm:$0xff]
    %s93 = scalar_lea.vmem [#allocation4], 64
    %v94 = vld [vmem:[%s93] sm:$0xff]
    %v95 = vld [vmem:[%s93 + $0x8] sm:$0xff]
    %v96 = vld [vmem:[%s93 + $0x10] sm:$0xff]
    %v97 = vld [vmem:[%s93 + $0x18] sm:$0xff]
    %v98 = vld [vmem:[%s93 + $0x20] sm:$0xff]
    %v99 = vld [vmem:[%s93 + $0x28] sm:$0xff]
    %v100 = vld [vmem:[%s93 + $0x30] sm:$0xff]
    %v101 = vld [vmem:[%s93 + $0x38] sm:$0xff]
    %v103 = vsel %vm61, %v91, 0
    %v106 = vsel %vm61, %v92, 0
    %108 = vmatprep.subr.mxu0 0.0
    %109 = vmatpush1.msra.mxu0 0.0
    %110 = vmatprep.subr.mxu0 0.0
    %111 = vmatpush1.msra.mxu0 0.0
    %112 = vmatprep.subr.mxu0 0.0
    %113 = vmatpush1.msra.mxu0 0.0
    %114 = vmatprep.subr.mxu0 0.0
    %115 = vmatpush1.msra.mxu0 0.0
    %116 = vmatprep.subr.mxu0 0.0
    %117 = vmatpush1.msra.mxu0 0.0
    %118 = vmatprep.subr.mxu0 0.0
    %119 = vmatpush1.msra.mxu0 0.0
    %120 = vmatprep.subr.mxu0 0.0
    %121 = vmatpush1.msra.mxu0 0.0
    %122 = vmatprep.subr.mxu0 0.0
    %123 = vmatpush1.msra.mxu0 0.0
    %124 = vmatprep.subr.mxu0 0.0
    %125 = vmatpush1.msra.mxu0 %v101
    %126 = vmatprep.subr.mxu0 0.0
    %127 = vmatpush1.msra.mxu0 %v100
    %128 = vmatprep.subr.mxu0 0.0
    %129 = vmatpush1.msra.mxu0 %v99
    %130 = vmatprep.subr.mxu0 0.0
    %131 = vmatpush1.msra.mxu0 %v98
    %132 = vmatprep.subr.mxu0 0.0
    %133 = vmatpush1.msra.mxu0 %v97
    %134 = vmatprep.subr.mxu0 0.0
    %135 = vmatpush1.msra.mxu0 %v96
    %136 = vmatprep.subr.mxu0 0.0
    %137 = vmatpush1.msra.mxu0 %v95
    %138 = vmatprep.subr.mxu0 0.0
    %139 = vmatpush1.msra.mxu0 %v94
    %140 = vmatprep.subr.mxu0 0.0
    %141 = vmatpush2.msra.mxu0 0.0
    %142 = vmatprep.subr.mxu0 0.0
    %143 = vmatpush2.msra.mxu0 0.0
    %144 = vmatprep.subr.mxu0 0.0
    %145 = vmatpush2.msra.mxu0 0.0
    %146 = vmatprep.subr.mxu0 0.0
    %147 = vmatpush2.msra.mxu0 0.0
    %148 = vmatprep.subr.mxu0 0.0
    %149 = vmatpush2.msra.mxu0 0.0
    %150 = vmatprep.subr.mxu0 0.0
    %151 = vmatpush2.msra.mxu0 0.0
    %152 = vmatprep.subr.mxu0 0.0
    %153 = vmatpush2.msra.mxu0 0.0
    %154 = vmatprep.subr.mxu0 0.0
    %155 = vmatpush2.msra.mxu0 0.0
    %156 = vmatprep.subr.mxu0 0.0
    %157 = vmatpush2.msra.mxu0 0.0
    %158 = vmatprep.subr.mxu0 0.0
    %159 = vmatpush2.msra.mxu0 0.0
    %160 = vmatprep.subr.mxu0 0.0
    %161 = vmatpush2.msra.mxu0 0.0
    %162 = vmatprep.subr.mxu0 0.0
    %163 = vmatpush2.msra.mxu0 0.0
    %164 = vmatprep.subr.mxu0 0.0
    %165 = vmatpush2.msra.mxu0 0.0
    %166 = vmatprep.subr.mxu0 0.0
    %167 = vmatpush2.msra.mxu0 0.0
    %168 = vmatprep.subr.mxu0 0.0
    %169 = vmatpush2.msra.mxu0 0.0
    %170 = vmatprep.subr.mxu0 0.0
    %171 = vmatpush2.msra.mxu0 0.0
    %172 = vmatprep.mubr.f32.mxu0 0.0
    %173 = vmatmul.mubr.f32.gmra.mxu0 %v103
    %v174 = vpop.f32.mrf.mxu0
    %v175 = vadd.f32 0.0, %v174
    %v176 = vpop.f32.mrf.mxu0
    %177 = vmatprep.mubr.f32.mxu0 0.0
    %178 = vmatmul.mubr.f32.gmra.mxu0 %v106
    %v179 = vpop.f32.mrf.mxu0
    %v180 = vadd.f32 0.0, %v179
    %v181 = vpop.f32.mrf.mxu0
    %182 = vdwg.mxu0
    %v184 = vsel %vm61, %v81, 0
    %v187 = vsel %vm61, %v82, 0
    %189 = vmatprep.subr.mxu0 0.0
    %190 = vmatpush1.msra.mxu0 0.0
    %191 = vmatprep.subr.mxu0 0.0
    %192 = vmatpush1.msra.mxu0 0.0
    %193 = vmatprep.subr.mxu0 0.0
    %194 = vmatpush1.msra.mxu0 0.0
    %195 = vmatprep.subr.mxu0 0.0
    %196 = vmatpush1.msra.mxu0 0.0
    %197 = vmatprep.subr.mxu0 0.0
    %198 = vmatpush1.msra.mxu0 0.0
    %199 = vmatprep.subr.mxu0 0.0
    %200 = vmatpush1.msra.mxu0 0.0
    %201 = vmatprep.subr.mxu0 0.0
    %202 = vmatpush1.msra.mxu0 0.0
    %203 = vmatprep.subr.mxu0 0.0
    %204 = vmatpush1.msra.mxu0 0.0
    %205 = vmatprep.subr.mxu0 0.0
    %206 = vmatpush1.msra.mxu0 %v90
    %207 = vmatprep.subr.mxu0 0.0
    %208 = vmatpush1.msra.mxu0 %v89
    %209 = vmatprep.subr.mxu0 0.0
    %210 = vmatpush1.msra.mxu0 %v88
    %211 = vmatprep.subr.mxu0 0.0
    %212 = vmatpush1.msra.mxu0 %v87
    %213 = vmatprep.subr.mxu0 0.0
    %214 = vmatpush1.msra.mxu0 %v86
    %215 = vmatprep.subr.mxu0 0.0
    %216 = vmatpush1.msra.mxu0 %v85
    %217 = vmatprep.subr.mxu0 0.0
    %218 = vmatpush1.msra.mxu0 %v84
    %219 = vmatprep.subr.mxu0 0.0
    %220 = vmatpush1.msra.mxu0 %v83
    %221 = vmatprep.subr.mxu0 0.0
    %222 = vmatpush2.msra.mxu0 0.0
    %223 = vmatprep.subr.mxu0 0.0
    %224 = vmatpush2.msra.mxu0 0.0
    %225 = vmatprep.subr.mxu0 0.0
    %226 = vmatpush2.msra.mxu0 0.0
    %227 = vmatprep.subr.mxu0 0.0
    %228 = vmatpush2.msra.mxu0 0.0
    %229 = vmatprep.subr.mxu0 0.0
    %230 = vmatpush2.msra.mxu0 0.0
    %231 = vmatprep.subr.mxu0 0.0
    %232 = vmatpush2.msra.mxu0 0.0
    %233 = vmatprep.subr.mxu0 0.0
    %234 = vmatpush2.msra.mxu0 0.0
    %235 = vmatprep.subr.mxu0 0.0
    %236 = vmatpush2.msra.mxu0 0.0
    %237 = vmatprep.subr.mxu0 0.0
    %238 = vmatpush2.msra.mxu0 0.0
    %239 = vmatprep.subr.mxu0 0.0
    %240 = vmatpush2.msra.mxu0 0.0
    %241 = vmatprep.subr.mxu0 0.0
    %242 = vmatpush2.msra.mxu0 0.0
    %243 = vmatprep.subr.mxu0 0.0
    %244 = vmatpush2.msra.mxu0 0.0
    %245 = vmatprep.subr.mxu0 0.0
    %246 = vmatpush2.msra.mxu0 0.0
    %247 = vmatprep.subr.mxu0 0.0
    %248 = vmatpush2.msra.mxu0 0.0
    %249 = vmatprep.subr.mxu0 0.0
    %250 = vmatpush2.msra.mxu0 0.0
    %251 = vmatprep.subr.mxu0 0.0
    %252 = vmatpush2.msra.mxu0 0.0
    %253 = vmatprep.mubr.f32.mxu0 0.0
    %254 = vmatmul.mubr.f32.gmra.mxu0 %v184
    %v255 = vpop.f32.mrf.mxu0
    %v256 = vadd.f32 %v175, %v255
    %v257 = vpop.f32.mrf.mxu0
    %258 = vmatprep.mubr.f32.mxu0 0.0
    %259 = vmatmul.mubr.f32.gmra.mxu0 %v187
    %v260 = vpop.f32.mrf.mxu0
    %v261 = vadd.f32 %v180, %v260
    %v262 = vpop.f32.mrf.mxu0
    %263 = vdwg.mxu0
    %v264 = vld [vmem:[#allocation2 + $0x2] sm:$0xff]
    %v265 = vld [vmem:[#allocation2 + $0xa] sm:$0xff]
    %s266 = scalar_lea.vmem [#allocation4], 128
    %v267 = vld [vmem:[%s266] sm:$0xff]
    %v268 = vld [vmem:[%s266 + $0x8] sm:$0xff]
    %v269 = vld [vmem:[%s266 + $0x10] sm:$0xff]
    %v270 = vld [vmem:[%s266 + $0x18] sm:$0xff]
    %v271 = vld [vmem:[%s266 + $0x20] sm:$0xff]
    %v272 = vld [vmem:[%s266 + $0x28] sm:$0xff]
    %v273 = vld [vmem:[%s266 + $0x30] sm:$0xff]
    %v274 = vld [vmem:[%s266 + $0x38] sm:$0xff]
    %v276 = vsel %vm61, %v264, 0
    %v279 = vsel %vm61, %v265, 0
    %281 = vmatprep.subr.mxu0 0.0
    %282 = vmatpush1.msra.mxu0 0.0
    %283 = vmatprep.subr.mxu0 0.0
    %284 = vmatpush1.msra.mxu0 0.0
    %285 = vmatprep.subr.mxu0 0.0
    %286 = vmatpush1.msra.mxu0 0.0
    %287 = vmatprep.subr.mxu0 0.0
    %288 = vmatpush1.msra.mxu0 0.0
    %289 = vmatprep.subr.mxu0 0.0
    %290 = vmatpush1.msra.mxu0 0.0
    %291 = vmatprep.subr.mxu0 0.0
    %292 = vmatpush1.msra.mxu0 0.0
    %293 = vmatprep.subr.mxu0 0.0
    %294 = vmatpush1.msra.mxu0 0.0
    %295 = vmatprep.subr.mxu0 0.0
    %296 = vmatpush1.msra.mxu0 0.0
    %297 = vmatprep.subr.mxu0 0.0
    %298 = vmatpush1.msra.mxu0 %v274
    %299 = vmatprep.subr.mxu0 0.0
    %300 = vmatpush1.msra.mxu0 %v273
    %301 = vmatprep.subr.mxu0 0.0
    %302 = vmatpush1.msra.mxu0 %v272
    %303 = vmatprep.subr.mxu0 0.0
    %304 = vmatpush1.msra.mxu0 %v271
    %305 = vmatprep.subr.mxu0 0.0
    %306 = vmatpush1.msra.mxu0 %v270
    %307 = vmatprep.subr.mxu0 0.0
    %308 = vmatpush1.msra.mxu0 %v269
    %309 = vmatprep.subr.mxu0 0.0
    %310 = vmatpush1.msra.mxu0 %v268
    %311 = vmatprep.subr.mxu0 0.0
    %312 = vmatpush1.msra.mxu0 %v267
    %313 = vmatprep.subr.mxu0 0.0
    %314 = vmatpush2.msra.mxu0 0.0
    %315 = vmatprep.subr.mxu0 0.0
    %316 = vmatpush2.msra.mxu0 0.0
    %317 = vmatprep.subr.mxu0 0.0
    %318 = vmatpush2.msra.mxu0 0.0
    %319 = vmatprep.subr.mxu0 0.0
    %320 = vmatpush2.msra.mxu0 0.0
    %321 = vmatprep.subr.mxu0 0.0
    %322 = vmatpush2.msra.mxu0 0.0
    %323 = vmatprep.subr.mxu0 0.0
    %324 = vmatpush2.msra.mxu0 0.0
    %325 = vmatprep.subr.mxu0 0.0
    %326 = vmatpush2.msra.mxu0 0.0
    %327 = vmatprep.subr.mxu0 0.0
    %328 = vmatpush2.msra.mxu0 0.0
    %329 = vmatprep.subr.mxu0 0.0
    %330 = vmatpush2.msra.mxu0 0.0
    %331 = vmatprep.subr.mxu0 0.0
    %332 = vmatpush2.msra.mxu0 0.0
    %333 = vmatprep.subr.mxu0 0.0
    %334 = vmatpush2.msra.mxu0 0.0
    %335 = vmatprep.subr.mxu0 0.0
    %336 = vmatpush2.msra.mxu0 0.0
    %337 = vmatprep.subr.mxu0 0.0
    %338 = vmatpush2.msra.mxu0 0.0
    %339 = vmatprep.subr.mxu0 0.0
    %340 = vmatpush2.msra.mxu0 0.0
    %341 = vmatprep.subr.mxu0 0.0
    %342 = vmatpush2.msra.mxu0 0.0
    %343 = vmatprep.subr.mxu0 0.0
    %344 = vmatpush2.msra.mxu0 0.0
    %345 = vmatprep.mubr.f32.mxu0 0.0
    %346 = vmatmul.mubr.f32.gmra.mxu0 %v276
    %v347 = vpop.f32.mrf.mxu0
    %v348 = vadd.f32 0.0, %v347
    %v349 = vpop.f32.mrf.mxu0
    %350 = vmatprep.mubr.f32.mxu0 0.0
    %351 = vmatmul.mubr.f32.gmra.mxu0 %v279
    %v352 = vpop.f32.mrf.mxu0
    %v353 = vadd.f32 0.0, %v352
    %v354 = vpop.f32.mrf.mxu0
    %355 = vdwg.mxu0
    %v356 = vadd.f32 %v256, %v348
    %v357 = vadd.f32 %v261, %v353
    %v358 = vld [vmem:[#allocation2 + $0x12] sm:$0xff]
    %v359 = vld [vmem:[#allocation2 + $0x1a] sm:$0xff]
    %v360 = vld [vmem:[#allocation2 + $0x13] sm:$0xff]
    %v361 = vld [vmem:[#allocation2 + $0x1b] sm:$0xff]
    %v363 = vsel %vm61, %v360, 0
    %v366 = vsel %vm61, %v361, 0
    %368 = vmatprep.subr.mxu0 0.0
    %369 = vmatpush1.msra.mxu0 0.0
    %370 = vmatprep.subr.mxu0 0.0
    %371 = vmatpush1.msra.mxu0 0.0
    %372 = vmatprep.subr.mxu0 0.0
    %373 = vmatpush1.msra.mxu0 0.0
    %374 = vmatprep.subr.mxu0 0.0
    %375 = vmatpush1.msra.mxu0 0.0
    %376 = vmatprep.subr.mxu0 0.0
    %377 = vmatpush1.msra.mxu0 0.0
    %378 = vmatprep.subr.mxu0 0.0
    %379 = vmatpush1.msra.mxu0 0.0
    %380 = vmatprep.subr.mxu0 0.0
    %381 = vmatpush1.msra.mxu0 0.0
    %382 = vmatprep.subr.mxu0 0.0
    %383 = vmatpush1.msra.mxu0 0.0
    %384 = vmatprep.subr.mxu0 0.0
    %385 = vmatpush1.msra.mxu0 %v101
    %386 = vmatprep.subr.mxu0 0.0
    %387 = vmatpush1.msra.mxu0 %v100
    %388 = vmatprep.subr.mxu0 0.0
    %389 = vmatpush1.msra.mxu0 %v99
    %390 = vmatprep.subr.mxu0 0.0
    %391 = vmatpush1.msra.mxu0 %v98
    %392 = vmatprep.subr.mxu0 0.0
    %393 = vmatpush1.msra.mxu0 %v97
    %394 = vmatprep.subr.mxu0 0.0
    %395 = vmatpush1.msra.mxu0 %v96
    %396 = vmatprep.subr.mxu0 0.0
    %397 = vmatpush1.msra.mxu0 %v95
    %398 = vmatprep.subr.mxu0 0.0
    %399 = vmatpush1.msra.mxu0 %v94
    %400 = vmatprep.subr.mxu0 0.0
    %401 = vmatpush2.msra.mxu0 0.0
    %402 = vmatprep.subr.mxu0 0.0
    %403 = vmatpush2.msra.mxu0 0.0
    %404 = vmatprep.subr.mxu0 0.0
    %405 = vmatpush2.msra.mxu0 0.0
    %406 = vmatprep.subr.mxu0 0.0
    %407 = vmatpush2.msra.mxu0 0.0
    %408 = vmatprep.subr.mxu0 0.0
    %409 = vmatpush2.msra.mxu0 0.0
    %410 = vmatprep.subr.mxu0 0.0
    %411 = vmatpush2.msra.mxu0 0.0
    %412 = vmatprep.subr.mxu0 0.0
    %413 = vmatpush2.msra.mxu0 0.0
    %414 = vmatprep.subr.mxu0 0.0
    %415 = vmatpush2.msra.mxu0 0.0
    %416 = vmatprep.subr.mxu0 0.0
    %417 = vmatpush2.msra.mxu0 0.0
    %418 = vmatprep.subr.mxu0 0.0
    %419 = vmatpush2.msra.mxu0 0.0
    %420 = vmatprep.subr.mxu0 0.0
    %421 = vmatpush2.msra.mxu0 0.0
    %422 = vmatprep.subr.mxu0 0.0
    %423 = vmatpush2.msra.mxu0 0.0
    %424 = vmatprep.subr.mxu0 0.0
    %425 = vmatpush2.msra.mxu0 0.0
    %426 = vmatprep.subr.mxu0 0.0
    %427 = vmatpush2.msra.mxu0 0.0
    %428 = vmatprep.subr.mxu0 0.0
    %429 = vmatpush2.msra.mxu0 0.0
    %430 = vmatprep.subr.mxu0 0.0
    %431 = vmatpush2.msra.mxu0 0.0
    %432 = vmatprep.mubr.f32.mxu0 0.0
    %433 = vmatmul.mubr.f32.gmra.mxu0 %v363
    %v434 = vpop.f32.mrf.mxu0
    %v435 = vadd.f32 0.0, %v434
    %v436 = vpop.f32.mrf.mxu0
    %437 = vmatprep.mubr.f32.mxu0 0.0
    %438 = vmatmul.mubr.f32.gmra.mxu0 %v366
    %v439 = vpop.f32.mrf.mxu0
    %v440 = vadd.f32 0.0, %v439
    %v441 = vpop.f32.mrf.mxu0
    %442 = vdwg.mxu0
    %v444 = vsel %vm61, %v358, 0
    %v447 = vsel %vm61, %v359, 0
    %449 = vmatprep.subr.mxu0 0.0
    %450 = vmatpush1.msra.mxu0 0.0
    %451 = vmatprep.subr.mxu0 0.0
    %452 = vmatpush1.msra.mxu0 0.0
    %453 = vmatprep.subr.mxu0 0.0
    %454 = vmatpush1.msra.mxu0 0.0
    %455 = vmatprep.subr.mxu0 0.0
    %456 = vmatpush1.msra.mxu0 0.0
    %457 = vmatprep.subr.mxu0 0.0
    %458 = vmatpush1.msra.mxu0 0.0
    %459 = vmatprep.subr.mxu0 0.0
    %460 = vmatpush1.msra.mxu0 0.0
    %461 = vmatprep.subr.mxu0 0.0
    %462 = vmatpush1.msra.mxu0 0.0
    %463 = vmatprep.subr.mxu0 0.0
    %464 = vmatpush1.msra.mxu0 0.0
    %465 = vmatprep.subr.mxu0 0.0
    %466 = vmatpush1.msra.mxu0 %v90
    %467 = vmatprep.subr.mxu0 0.0
    %468 = vmatpush1.msra.mxu0 %v89
    %469 = vmatprep.subr.mxu0 0.0
    %470 = vmatpush1.msra.mxu0 %v88
    %471 = vmatprep.subr.mxu0 0.0
    %472 = vmatpush1.msra.mxu0 %v87
    %473 = vmatprep.subr.mxu0 0.0
    %474 = vmatpush1.msra.mxu0 %v86
    %475 = vmatprep.subr.mxu0 0.0
    %476 = vmatpush1.msra.mxu0 %v85
    %477 = vmatprep.subr.mxu0 0.0
    %478 = vmatpush1.msra.mxu0 %v84
    %479 = vmatprep.subr.mxu0 0.0
    %480 = vmatpush1.msra.mxu0 %v83
    %481 = vmatprep.subr.mxu0 0.0
    %482 = vmatpush2.msra.mxu0 0.0
    %483 = vmatprep.subr.mxu0 0.0
    %484 = vmatpush2.msra.mxu0 0.0
    %485 = vmatprep.subr.mxu0 0.0
    %486 = vmatpush2.msra.mxu0 0.0
    %487 = vmatprep.subr.mxu0 0.0
    %488 = vmatpush2.msra.mxu0 0.0
    %489 = vmatprep.subr.mxu0 0.0
    %490 = vmatpush2.msra.mxu0 0.0
    %491 = vmatprep.subr.mxu0 0.0
    %492 = vmatpush2.msra.mxu0 0.0
    %493 = vmatprep.subr.mxu0 0.0
    %494 = vmatpush2.msra.mxu0 0.0
    %495 = vmatprep.subr.mxu0 0.0
    %496 = vmatpush2.msra.mxu0 0.0
    %497 = vmatprep.subr.mxu0 0.0
    %498 = vmatpush2.msra.mxu0 0.0
    %499 = vmatprep.subr.mxu0 0.0
    %500 = vmatpush2.msra.mxu0 0.0
    %501 = vmatprep.subr.mxu0 0.0
    %502 = vmatpush2.msra.mxu0 0.0
    %503 = vmatprep.subr.mxu0 0.0
    %504 = vmatpush2.msra.mxu0 0.0
    %505 = vmatprep.subr.mxu0 0.0
    %506 = vmatpush2.msra.mxu0 0.0
    %507 = vmatprep.subr.mxu0 0.0
    %508 = vmatpush2.msra.mxu0 0.0
    %509 = vmatprep.subr.mxu0 0.0
    %510 = vmatpush2.msra.mxu0 0.0
    %511 = vmatprep.subr.mxu0 0.0
    %512 = vmatpush2.msra.mxu0 0.0
    %513 = vmatprep.mubr.f32.mxu0 0.0
    %514 = vmatmul.mubr.f32.gmra.mxu0 %v444
    %v515 = vpop.f32.mrf.mxu0
    %v516 = vadd.f32 %v435, %v515
    %v517 = vpop.f32.mrf.mxu0
    %518 = vmatprep.mubr.f32.mxu0 0.0
    %519 = vmatmul.mubr.f32.gmra.mxu0 %v447
    %v520 = vpop.f32.mrf.mxu0
    %v521 = vadd.f32 %v440, %v520
    %v522 = vpop.f32.mrf.mxu0
    %523 = vdwg.mxu0
    %v524 = vld [vmem:[#allocation2 + $0x14] sm:$0xff]
    %v525 = vld [vmem:[#allocation2 + $0x1c] sm:$0xff]
    %v527 = vsel %vm61, %v524, 0
    %v530 = vsel %vm61, %v525, 0
    %532 = vmatprep.subr.mxu0 0.0
    %533 = vmatpush1.msra.mxu0 0.0
    %534 = vmatprep.subr.mxu0 0.0
    %535 = vmatpush1.msra.mxu0 0.0
    %536 = vmatprep.subr.mxu0 0.0
    %537 = vmatpush1.msra.mxu0 0.0
    %538 = vmatprep.subr.mxu0 0.0
    %539 = vmatpush1.msra.mxu0 0.0
    %540 = vmatprep.subr.mxu0 0.0
    %541 = vmatpush1.msra.mxu0 0.0
    %542 = vmatprep.subr.mxu0 0.0
    %543 = vmatpush1.msra.mxu0 0.0
    %544 = vmatprep.subr.mxu0 0.0
    %545 = vmatpush1.msra.mxu0 0.0
    %546 = vmatprep.subr.mxu0 0.0
    %547 = vmatpush1.msra.mxu0 0.0
    %548 = vmatprep.subr.mxu0 0.0
    %549 = vmatpush1.msra.mxu0 %v274
    %550 = vmatprep.subr.mxu0 0.0
    %551 = vmatpush1.msra.mxu0 %v273
    %552 = vmatprep.subr.mxu0 0.0
    %553 = vmatpush1.msra.mxu0 %v272
    %554 = vmatprep.subr.mxu0 0.0
    %555 = vmatpush1.msra.mxu0 %v271
    %556 = vmatprep.subr.mxu0 0.0
    %557 = vmatpush1.msra.mxu0 %v270
    %558 = vmatprep.subr.mxu0 0.0
    %559 = vmatpush1.msra.mxu0 %v269
    %560 = vmatprep.subr.mxu0 0.0
    %561 = vmatpush1.msra.mxu0 %v268
    %562 = vmatprep.subr.mxu0 0.0
    %563 = vmatpush1.msra.mxu0 %v267
    %564 = vmatprep.subr.mxu0 0.0
    %565 = vmatpush2.msra.mxu0 0.0
    %566 = vmatprep.subr.mxu0 0.0
    %567 = vmatpush2.msra.mxu0 0.0
    %568 = vmatprep.subr.mxu0 0.0
    %569 = vmatpush2.msra.mxu0 0.0
    %570 = vmatprep.subr.mxu0 0.0
    %571 = vmatpush2.msra.mxu0 0.0
    %572 = vmatprep.subr.mxu0 0.0
    %573 = vmatpush2.msra.mxu0 0.0
    %574 = vmatprep.subr.mxu0 0.0
    %575 = vmatpush2.msra.mxu0 0.0
    %576 = vmatprep.subr.mxu0 0.0
    %577 = vmatpush2.msra.mxu0 0.0
    %578 = vmatprep.subr.mxu0 0.0
    %579 = vmatpush2.msra.mxu0 0.0
    %580 = vmatprep.subr.mxu0 0.0
    %581 = vmatpush2.msra.mxu0 0.0
    %582 = vmatprep.subr.mxu0 0.0
    %583 = vmatpush2.msra.mxu0 0.0
    %584 = vmatprep.subr.mxu0 0.0
    %585 = vmatpush2.msra.mxu0 0.0
    %586 = vmatprep.subr.mxu0 0.0
    %587 = vmatpush2.msra.mxu0 0.0
    %588 = vmatprep.subr.mxu0 0.0
    %589 = vmatpush2.msra.mxu0 0.0
    %590 = vmatprep.subr.mxu0 0.0
    %591 = vmatpush2.msra.mxu0 0.0
    %592 = vmatprep.subr.mxu0 0.0
    %593 = vmatpush2.msra.mxu0 0.0
    %594 = vmatprep.subr.mxu0 0.0
    %595 = vmatpush2.msra.mxu0 0.0
    %596 = vmatprep.mubr.f32.mxu0 0.0
    %597 = vmatmul.mubr.f32.gmra.mxu0 %v527
    %v598 = vpop.f32.mrf.mxu0
    %v599 = vadd.f32 0.0, %v598
    %v600 = vpop.f32.mrf.mxu0
    %601 = vmatprep.mubr.f32.mxu0 0.0
    %602 = vmatmul.mubr.f32.gmra.mxu0 %v530
    %v603 = vpop.f32.mrf.mxu0
    %v604 = vadd.f32 0.0, %v603
    %v605 = vpop.f32.mrf.mxu0
    %606 = vdwg.mxu0
    %v607 = vadd.f32 %v516, %v599
    %v608 = vadd.f32 %v521, %v604
    %v609 = vadd.f32 %v356, %v357
    %v610 = vrot.slane %v609, 4
    %v611 = vadd.f32 %v609, %v610
    %v612 = vrot.slane %v611, 2
    %v613 = vadd.f32 %v611, %v612
    %v614 = vrot.slane %v613, 1
    %v615 = vadd.f32 %v613, %v614
    %v616 = vadd.f32 %v615, 0.0
    %v617 = vmul.f32 %v356, %v356
    %v618 = vmul.f32 %v357, %v357
    %v619 = vadd.f32 %v617, %v618
    %v620 = vrot.slane %v619, 4
    %v621 = vadd.f32 %v619, %v620
    %v622 = vrot.slane %v621, 2
    %v623 = vadd.f32 %v621, %v622
    %v624 = vrot.slane %v623, 1
    %v625 = vadd.f32 %v623, %v624
    %v626 = vadd.f32 %v625, 0.0
    %v627 = vadd.f32 %v607, %v608
    %v628 = vrot.slane %v627, 4
    %v629 = vadd.f32 %v627, %v628
    %v630 = vrot.slane %v629, 2
    %v631 = vadd.f32 %v629, %v630
    %v632 = vrot.slane %v631, 1
    %v633 = vadd.f32 %v631, %v632
    %v634 = vadd.f32 %v616, %v633
    %v635 = vmul.f32 %v607, %v607
    %v636 = vmul.f32 %v608, %v608
    %v637 = vadd.f32 %v635, %v636
    %v638 = vrot.slane %v637, 4
    %v639 = vadd.f32 %v637, %v638
    %v640 = vrot.slane %v639, 2
    %v641 = vadd.f32 %v639, %v640
    %v642 = vrot.slane %v641, 1
    %v643 = vadd.f32 %v641, %v642
    %v644 = vadd.f32 %v626, %v643
    %v645 = vld [vmem:[%s1] sm:$0xff]
    %v646 = vld [vmem:[%s1 + $0x8] sm:$0xff]
    %v647 = vld [vmem:[%s1 + $0x10] sm:$0xff]
    %v648 = vld [vmem:[%s1 + $0x18] sm:$0xff]
    %v649 = vld [vmem:[%s1 + $0x20] sm:$0xff]
    %v650 = vld [vmem:[%s1 + $0x28] sm:$0xff]
    %v651 = vld [vmem:[%s1 + $0x30] sm:$0xff]
    %v652 = vld [vmem:[%s1 + $0x38] sm:$0xff]
    %v653 = vld [vmem:[%s1 + $0x40] sm:$0xff]
    %v654 = vld [vmem:[%s1 + $0x48] sm:$0xff]
    %v655 = vld [vmem:[%s1 + $0x50] sm:$0xff]
    %v656 = vld [vmem:[%s1 + $0x58] sm:$0xff]
    %v657 = vld [vmem:[%s1 + $0x60] sm:$0xff]
    %v658 = vld [vmem:[%s1 + $0x68] sm:$0xff]
    %v659 = vld [vmem:[%s1 + $0x70] sm:$0xff]
    %v660 = vld [vmem:[%s1 + $0x78] sm:$0xff]
    %661 = vmatprep.subr.mxu0 0.0
    %662 = vmatpush1.msra.mxu0 %v660
    %663 = vmatprep.subr.mxu0 0.0
    %664 = vmatpush1.msra.mxu0 %v659
    %665 = vmatprep.subr.mxu0 0.0
    %666 = vmatpush1.msra.mxu0 %v658
    %667 = vmatprep.subr.mxu0 0.0
    %668 = vmatpush1.msra.mxu0 %v657
    %669 = vmatprep.subr.mxu0 0.0
    %670 = vmatpush1.msra.mxu0 %v656
    %671 = vmatprep.subr.mxu0 0.0
    %672 = vmatpush1.msra.mxu0 %v655
    %673 = vmatprep.subr.mxu0 0.0
    %674 = vmatpush1.msra.mxu0 %v654
    %675 = vmatprep.subr.mxu0 0.0
    %676 = vmatpush1.msra.mxu0 %v653
    %677 = vmatprep.subr.mxu0 0.0
    %678 = vmatpush1.msra.mxu0 %v652
    %679 = vmatprep.subr.mxu0 0.0
    %680 = vmatpush1.msra.mxu0 %v651
    %681 = vmatprep.subr.mxu0 0.0
    %682 = vmatpush1.msra.mxu0 %v650
    %683 = vmatprep.subr.mxu0 0.0
    %684 = vmatpush1.msra.mxu0 %v649
    %685 = vmatprep.subr.mxu0 0.0
    %686 = vmatpush1.msra.mxu0 %v648
    %687 = vmatprep.subr.mxu0 0.0
    %688 = vmatpush1.msra.mxu0 %v647
    %689 = vmatprep.subr.mxu0 0.0
    %690 = vmatpush1.msra.mxu0 %v646
    %691 = vmatprep.subr.mxu0 0.0
    %692 = vmatpush1.msra.mxu0 %v645
    %693 = vmatprep.subr.mxu0 0.0
    %694 = vmatpush2.msra.mxu0 0.0
    %695 = vmatprep.subr.mxu0 0.0
    %696 = vmatpush2.msra.mxu0 0.0
    %697 = vmatprep.subr.mxu0 0.0
    %698 = vmatpush2.msra.mxu0 0.0
    %699 = vmatprep.subr.mxu0 0.0
    %700 = vmatpush2.msra.mxu0 0.0
    %701 = vmatprep.subr.mxu0 0.0
    %702 = vmatpush2.msra.mxu0 0.0
    %703 = vmatprep.subr.mxu0 0.0
    %704 = vmatpush2.msra.mxu0 0.0
    %705 = vmatprep.subr.mxu0 0.0
    %706 = vmatpush2.msra.mxu0 0.0
    %707 = vmatprep.subr.mxu0 0.0
    %708 = vmatpush2.msra.mxu0 0.0
    %709 = vmatprep.subr.mxu0 0.0
    %710 = vmatpush2.msra.mxu0 0.0
    %711 = vmatprep.subr.mxu0 0.0
    %712 = vmatpush2.msra.mxu0 0.0
    %713 = vmatprep.subr.mxu0 0.0
    %714 = vmatpush2.msra.mxu0 0.0
    %715 = vmatprep.subr.mxu0 0.0
    %716 = vmatpush2.msra.mxu0 0.0
    %717 = vmatprep.subr.mxu0 0.0
    %718 = vmatpush2.msra.mxu0 0.0
    %719 = vmatprep.subr.mxu0 0.0
    %720 = vmatpush2.msra.mxu0 0.0
    %721 = vmatprep.subr.mxu0 0.0
    %722 = vmatpush2.msra.mxu0 0.0
    %723 = vmatprep.subr.mxu0 0.0
    %724 = vmatpush2.msra.mxu0 0.0
    %725 = vmatprep.mubr.f32.mxu0 0.0
    %726 = vmatmul.mubr.f32.gmra.mxu0 %v634
    %v727 = vpop.f32.mrf.mxu0
    %v728 = vadd.f32 0.0, %v727
    %v729 = vpop.f32.mrf.mxu0
    %730 = vdwg.mxu0
    %731 = vmatprep.subr.mxu0 0.0
    %732 = vmatpush1.msra.mxu0 %v660
    %733 = vmatprep.subr.mxu0 0.0
    %734 = vmatpush1.msra.mxu0 %v659
    %735 = vmatprep.subr.mxu0 0.0
    %736 = vmatpush1.msra.mxu0 %v658
    %737 = vmatprep.subr.mxu0 0.0
    %738 = vmatpush1.msra.mxu0 %v657
    %739 = vmatprep.subr.mxu0 0.0
    %740 = vmatpush1.msra.mxu0 %v656
    %741 = vmatprep.subr.mxu0 0.0
    %742 = vmatpush1.msra.mxu0 %v655
    %743 = vmatprep.subr.mxu0 0.0
    %744 = vmatpush1.msra.mxu0 %v654
    %745 = vmatprep.subr.mxu0 0.0
    %746 = vmatpush1.msra.mxu0 %v653
    %747 = vmatprep.subr.mxu0 0.0
    %748 = vmatpush1.msra.mxu0 %v652
    %749 = vmatprep.subr.mxu0 0.0
    %750 = vmatpush1.msra.mxu0 %v651
    %751 = vmatprep.subr.mxu0 0.0
    %752 = vmatpush1.msra.mxu0 %v650
    %753 = vmatprep.subr.mxu0 0.0
    %754 = vmatpush1.msra.mxu0 %v649
    %755 = vmatprep.subr.mxu0 0.0
    %756 = vmatpush1.msra.mxu0 %v648
    %757 = vmatprep.subr.mxu0 0.0
    %758 = vmatpush1.msra.mxu0 %v647
    %759 = vmatprep.subr.mxu0 0.0
    %760 = vmatpush1.msra.mxu0 %v646
    %761 = vmatprep.subr.mxu0 0.0
    %762 = vmatpush1.msra.mxu0 %v645
    %763 = vmatprep.subr.mxu0 0.0
    %764 = vmatpush2.msra.mxu0 0.0
    %765 = vmatprep.subr.mxu0 0.0
    %766 = vmatpush2.msra.mxu0 0.0
    %767 = vmatprep.subr.mxu0 0.0
    %768 = vmatpush2.msra.mxu0 0.0
    %769 = vmatprep.subr.mxu0 0.0
    %770 = vmatpush2.msra.mxu0 0.0
    %771 = vmatprep.subr.mxu0 0.0
    %772 = vmatpush2.msra.mxu0 0.0
    %773 = vmatprep.subr.mxu0 0.0
    %774 = vmatpush2.msra.mxu0 0.0
    %775 = vmatprep.subr.mxu0 0.0
    %776 = vmatpush2.msra.mxu0 0.0
    %777 = vmatprep.subr.mxu0 0.0
    %778 = vmatpush2.msra.mxu0 0.0
    %779 = vmatprep.subr.mxu0 0.0
    %780 = vmatpush2.msra.mxu0 0.0
    %781 = vmatprep.subr.mxu0 0.0
    %782 = vmatpush2.msra.mxu0 0.0
    %783 = vmatprep.subr.mxu0 0.0
    %784 = vmatpush2.msra.mxu0 0.0
    %785 = vmatprep.subr.mxu0 0.0
    %786 = vmatpush2.msra.mxu0 0.0
    %787 = vmatprep.subr.mxu0 0.0
    %788 = vmatpush2.msra.mxu0 0.0
    %789 = vmatprep.subr.mxu0 0.0
    %790 = vmatpush2.msra.mxu0 0.0
    %791 = vmatprep.subr.mxu0 0.0
    %792 = vmatpush2.msra.mxu0 0.0
    %793 = vmatprep.subr.mxu0 0.0
    %794 = vmatpush2.msra.mxu0 0.0
    %795 = vmatprep.mubr.f32.mxu0 0.0
    %796 = vmatmul.mubr.f32.gmra.mxu0 %v644
    %v797 = vpop.f32.mrf.mxu0
    %v798 = vadd.f32 0.0, %v797
    %v799 = vpop.f32.mrf.mxu0
    %800 = vdwg.mxu0
    %v801 = vrcp.pop 512.0
    %v802 = vmul.f32 %v728, %v801
    %v803 = vmul.f32 %v798, %v801
    %v804 = vmul.f32 %v802, %v802
    %v805 = vsub.f32 %v803, %v804
    %v806 = vld [vmem:[%s4] sm:$0x1]
    %v807 = vadd.f32 %v805, 1e-05
    %v808 = vrsqrt.pop %v807
    %v809 = vmul.f32 %v806, %v808
    %v810 = vld [vmem:[%s5] sm:$0x1]
    %v811 = vmul.f32 %v802, %v809
    %v812 = vsub.f32 %v810, %v811
    %v813 = vld [vmem:[%s2] sm:$0xff]
    %vm814 = vcmask 64512
    %v816 = vsel %vm814, %v809, 0
    %818 = vmatprep.subr.mxu0 0.0
    %819 = vmatpush1.msra.mxu0 0.0
    %820 = vmatprep.subr.mxu0 0.0
    %821 = vmatpush1.msra.mxu0 0.0
    %822 = vmatprep.subr.mxu0 0.0
    %823 = vmatpush1.msra.mxu0 0.0
    %824 = vmatprep.subr.mxu0 0.0
    %825 = vmatpush1.msra.mxu0 0.0
    %826 = vmatprep.subr.mxu0 0.0
    %827 = vmatpush1.msra.mxu0 0.0
    %828 = vmatprep.subr.mxu0 0.0
    %829 = vmatpush1.msra.mxu0 0.0
    %830 = vmatprep.subr.mxu0 0.0
    %831 = vmatpush1.msra.mxu0 0.0
    %832 = vmatprep.subr.mxu0 0.0
    %833 = vmatpush1.msra.mxu0 0.0
    %834 = vmatprep.subr.mxu0 0.0
    %835 = vmatpush1.msra.mxu0 0.0
    %836 = vmatprep.subr.mxu0 0.0
    %837 = vmatpush1.msra.mxu0 0.0
    %838 = vmatprep.subr.mxu0 0.0
    %839 = vmatpush1.msra.mxu0 0.0
    %840 = vmatprep.subr.mxu0 0.0
    %841 = vmatpush1.msra.mxu0 0.0
    %842 = vmatprep.subr.mxu0 0.0
    %843 = vmatpush1.msra.mxu0 0.0
    %844 = vmatprep.subr.mxu0 0.0
    %845 = vmatpush1.msra.mxu0 0.0
    %846 = vmatprep.subr.mxu0 0.0
    %847 = vmatpush1.msra.mxu0 0.0
    %848 = vmatprep.subr.mxu0 0.0
    %849 = vmatpush1.msra.mxu0 %v813
    %850 = vmatprep.subr.mxu0 0.0
    %851 = vmatpush2.msra.mxu0 0.0
    %852 = vmatprep.subr.mxu0 0.0
    %853 = vmatpush2.msra.mxu0 0.0
    %854 = vmatprep.subr.mxu0 0.0
    %855 = vmatpush2.msra.mxu0 0.0
    %856 = vmatprep.subr.mxu0 0.0
    %857 = vmatpush2.msra.mxu0 0.0
    %858 = vmatprep.subr.mxu0 0.0
    %859 = vmatpush2.msra.mxu0 0.0
    %860 = vmatprep.subr.mxu0 0.0
    %861 = vmatpush2.msra.mxu0 0.0
    %862 = vmatprep.subr.mxu0 0.0
    %863 = vmatpush2.msra.mxu0 0.0
    %864 = vmatprep.subr.mxu0 0.0
    %865 = vmatpush2.msra.mxu0 0.0
    %866 = vmatprep.subr.mxu0 0.0
    %867 = vmatpush2.msra.mxu0 0.0
    %868 = vmatprep.subr.mxu0 0.0
    %869 = vmatpush2.msra.mxu0 0.0
    %870 = vmatprep.subr.mxu0 0.0
    %871 = vmatpush2.msra.mxu0 0.0
    %872 = vmatprep.subr.mxu0 0.0
    %873 = vmatpush2.msra.mxu0 0.0
    %874 = vmatprep.subr.mxu0 0.0
    %875 = vmatpush2.msra.mxu0 0.0
    %876 = vmatprep.subr.mxu0 0.0
    %877 = vmatpush2.msra.mxu0 0.0
    %878 = vmatprep.subr.mxu0 0.0
    %879 = vmatpush2.msra.mxu0 0.0
    %880 = vmatprep.subr.mxu0 0.0
    %881 = vmatpush2.msra.mxu0 0.0
    %882 = vmatprep.mubr.f32.mxu0 0.0
    %883 = vmatmul.mubr.f32.gmra.mxu0 %v816
    %v884 = vpop.f32.mrf.mxu0
    %v885 = vadd.f32 0.0, %v884
    %v886 = vpop.f32.mrf.mxu0
    %887 = vdwg.mxu0
    %v889 = vsel %vm814, %v812, 0
    %891 = vmatprep.subr.mxu0 0.0
    %892 = vmatpush1.msra.mxu0 0.0
    %893 = vmatprep.subr.mxu0 0.0
    %894 = vmatpush1.msra.mxu0 0.0
    %895 = vmatprep.subr.mxu0 0.0
    %896 = vmatpush1.msra.mxu0 0.0
    %897 = vmatprep.subr.mxu0 0.0
    %898 = vmatpush1.msra.mxu0 0.0
    %899 = vmatprep.subr.mxu0 0.0
    %900 = vmatpush1.msra.mxu0 0.0
    %901 = vmatprep.subr.mxu0 0.0
    %902 = vmatpush1.msra.mxu0 0.0
    %903 = vmatprep.subr.mxu0 0.0
    %904 = vmatpush1.msra.mxu0 0.0
    %905 = vmatprep.subr.mxu0 0.0
    %906 = vmatpush1.msra.mxu0 0.0
    %907 = vmatprep.subr.mxu0 0.0
    %908 = vmatpush1.msra.mxu0 0.0
    %909 = vmatprep.subr.mxu0 0.0
    %910 = vmatpush1.msra.mxu0 0.0
    %911 = vmatprep.subr.mxu0 0.0
    %912 = vmatpush1.msra.mxu0 0.0
    %913 = vmatprep.subr.mxu0 0.0
    %914 = vmatpush1.msra.mxu0 0.0
    %915 = vmatprep.subr.mxu0 0.0
    %916 = vmatpush1.msra.mxu0 0.0
    %917 = vmatprep.subr.mxu0 0.0
    %918 = vmatpush1.msra.mxu0 0.0
    %919 = vmatprep.subr.mxu0 0.0
    %920 = vmatpush1.msra.mxu0 0.0
    %921 = vmatprep.subr.mxu0 0.0
    %922 = vmatpush1.msra.mxu0 %v813
    %923 = vmatprep.subr.mxu0 0.0
    %924 = vmatpush2.msra.mxu0 0.0
    %925 = vmatprep.subr.mxu0 0.0
    %926 = vmatpush2.msra.mxu0 0.0
    %927 = vmatprep.subr.mxu0 0.0
    %928 = vmatpush2.msra.mxu0 0.0
    %929 = vmatprep.subr.mxu0 0.0
    %930 = vmatpush2.msra.mxu0 0.0
    %931 = vmatprep.subr.mxu0 0.0
    %932 = vmatpush2.msra.mxu0 0.0
    %933 = vmatprep.subr.mxu0 0.0
    %934 = vmatpush2.msra.mxu0 0.0
    %935 = vmatprep.subr.mxu0 0.0
    %936 = vmatpush2.msra.mxu0 0.0
    %937 = vmatprep.subr.mxu0 0.0
    %938 = vmatpush2.msra.mxu0 0.0
    %939 = vmatprep.subr.mxu0 0.0
    %940 = vmatpush2.msra.mxu0 0.0
    %941 = vmatprep.subr.mxu0 0.0
    %942 = vmatpush2.msra.mxu0 0.0
    %943 = vmatprep.subr.mxu0 0.0
    %944 = vmatpush2.msra.mxu0 0.0
    %945 = vmatprep.subr.mxu0 0.0
    %946 = vmatpush2.msra.mxu0 0.0
    %947 = vmatprep.subr.mxu0 0.0
    %948 = vmatpush2.msra.mxu0 0.0
    %949 = vmatprep.subr.mxu0 0.0
    %950 = vmatpush2.msra.mxu0 0.0
    %951 = vmatprep.subr.mxu0 0.0
    %952 = vmatpush2.msra.mxu0 0.0
    %953 = vmatprep.subr.mxu0 0.0
    %954 = vmatpush2.msra.mxu0 0.0
    %955 = vmatprep.mubr.f32.mxu0 0.0
    %956 = vmatmul.mubr.f32.gmra.mxu0 %v889
    %v957 = vpop.f32.mrf.mxu0
    %v958 = vadd.f32 0.0, %v957
    %v959 = vpop.f32.mrf.mxu0
    %960 = vdwg.mxu0
    %v961 = vlaneseq
    %v962 = vshrl.u32 %v961, 7
    %v963 = vsub.s32 0, %v962
    %v964 = vrot.slane %v885, %v963
    %v965 = vmul.f32 %v356, %v964
    %v966 = vmul.f32 %v357, %v964
    %v967 = vlaneseq
    %v968 = vshrl.u32 %v967, 7
    %v969 = vsub.s32 0, %v968
    %v970 = vrot.slane %v958, %v969
    %v971 = vadd.f32 %v965, %v970
    %v972 = vadd.f32 %v966, %v970
    %vm973 = vcmp.ge.f32.partialorder %v971, 0.0
    %vm974 = vcmp.ge.f32.partialorder %v972, 0.0
    %v975 = vmul.f32 %v971, 0.01
    %v976 = vmul.f32 %v972, 0.01
    %v977 = vsel %vm973, %v971, %v975
    %v978 = vsel %vm974, %v972, %v976
    %979 = vst [vmem:[#allocation3 + $0x1] sm:$0xff] %v977
    %980 = vst [vmem:[#allocation3 + $0x9] sm:$0xff] %v978
    %v981 = vmul.f32 %v607, %v964
    %v982 = vmul.f32 %v608, %v964
    %v983 = vadd.f32 %v981, %v970
    %v984 = vadd.f32 %v982, %v970
    %vm985 = vcmp.ge.f32.partialorder %v983, 0.0
    %vm986 = vcmp.ge.f32.partialorder %v984, 0.0
    %v987 = vmul.f32 %v983, 0.01
    %v988 = vmul.f32 %v984, 0.01
    %v989 = vsel %vm985, %v983, %v987
    %v990 = vsel %vm986, %v984, %v988
    %991 = vst [vmem:[#allocation3 + $0x13] sm:$0xff] %v989
    %992 = vst [vmem:[#allocation3 + $0x1b] sm:$0xff] %v990
    %v993 = vld [vmem:[#allocation3] sm:$0xff]
    %v994 = vld [vmem:[#allocation3 + $0x8] sm:$0xff]
    %v995 = vld [vmem:[#allocation7] sm:$0xff]
    %v996 = vld [vmem:[#allocation7 + $0x8] sm:$0xff]
    %v997 = vld [vmem:[#allocation7 + $0x10] sm:$0xff]
    %v998 = vld [vmem:[#allocation7 + $0x18] sm:$0xff]
    %v999 = vld [vmem:[#allocation7 + $0x20] sm:$0xff]
    %v1000 = vld [vmem:[#allocation7 + $0x28] sm:$0xff]
    %v1001 = vld [vmem:[#allocation7 + $0x30] sm:$0xff]
    %v1002 = vld [vmem:[#allocation7 + $0x38] sm:$0xff]
    %v1003 = vld [vmem:[#allocation7 + $0x40] sm:$0xff]
    %v1004 = vld [vmem:[#allocation7 + $0x48] sm:$0xff]
    %v1005 = vld [vmem:[#allocation7 + $0x50] sm:$0xff]
    %v1006 = vld [vmem:[#allocation7 + $0x58] sm:$0xff]
    %v1007 = vld [vmem:[#allocation7 + $0x60] sm:$0xff]
    %v1008 = vld [vmem:[#allocation7 + $0x68] sm:$0xff]
    %v1009 = vld [vmem:[#allocation7 + $0x70] sm:$0xff]
    %v1010 = vld [vmem:[#allocation7 + $0x78] sm:$0xff]
    %v1011 = vld [vmem:[#allocation3 + $0x1] sm:$0xff]
    %v1012 = vld [vmem:[#allocation3 + $0x9] sm:$0xff]
    %s1013 = scalar_lea.vmem [#allocation7], 128
    %v1014 = vld [vmem:[%s1013] sm:$0xff]
    %v1015 = vld [vmem:[%s1013 + $0x8] sm:$0xff]
    %v1016 = vld [vmem:[%s1013 + $0x10] sm:$0xff]
    %v1017 = vld [vmem:[%s1013 + $0x18] sm:$0xff]
    %v1018 = vld [vmem:[%s1013 + $0x20] sm:$0xff]
    %v1019 = vld [vmem:[%s1013 + $0x28] sm:$0xff]
    %v1020 = vld [vmem:[%s1013 + $0x30] sm:$0xff]
    %v1021 = vld [vmem:[%s1013 + $0x38] sm:$0xff]
    %v1022 = vld [vmem:[%s1013 + $0x40] sm:$0xff]
    %v1023 = vld [vmem:[%s1013 + $0x48] sm:$0xff]
    %v1024 = vld [vmem:[%s1013 + $0x50] sm:$0xff]
    %v1025 = vld [vmem:[%s1013 + $0x58] sm:$0xff]
    %v1026 = vld [vmem:[%s1013 + $0x60] sm:$0xff]
    %v1027 = vld [vmem:[%s1013 + $0x68] sm:$0xff]
    %v1028 = vld [vmem:[%s1013 + $0x70] sm:$0xff]
    %v1029 = vld [vmem:[%s1013 + $0x78] sm:$0xff]
    %1030 = vmatprep.subr.mxu0 0.0
    %1031 = vmatpush1.msra.mxu0 %v1029
    %1032 = vmatprep.subr.mxu0 0.0
    %1033 = vmatpush1.msra.mxu0 %v1028
    %1034 = vmatprep.subr.mxu0 0.0
    %1035 = vmatpush1.msra.mxu0 %v1027
    %1036 = vmatprep.subr.mxu0 0.0
    %1037 = vmatpush1.msra.mxu0 %v1026
    %1038 = vmatprep.subr.mxu0 0.0
    %1039 = vmatpush1.msra.mxu0 %v1025
    %1040 = vmatprep.subr.mxu0 0.0
    %1041 = vmatpush1.msra.mxu0 %v1024
    %1042 = vmatprep.subr.mxu0 0.0
    %1043 = vmatpush1.msra.mxu0 %v1023
    %1044 = vmatprep.subr.mxu0 0.0
    %1045 = vmatpush1.msra.mxu0 %v1022
    %1046 = vmatprep.subr.mxu0 0.0
    %1047 = vmatpush1.msra.mxu0 %v1021
    %1048 = vmatprep.subr.mxu0 0.0
    %1049 = vmatpush1.msra.mxu0 %v1020
    %1050 = vmatprep.subr.mxu0 0.0
    %1051 = vmatpush1.msra.mxu0 %v1019
    %1052 = vmatprep.subr.mxu0 0.0
    %1053 = vmatpush1.msra.mxu0 %v1018
    %1054 = vmatprep.subr.mxu0 0.0
    %1055 = vmatpush1.msra.mxu0 %v1017
    %1056 = vmatprep.subr.mxu0 0.0
    %1057 = vmatpush1.msra.mxu0 %v1016
    %1058 = vmatprep.subr.mxu0 0.0
    %1059 = vmatpush1.msra.mxu0 %v1015
    %1060 = vmatprep.subr.mxu0 0.0
    %1061 = vmatpush1.msra.mxu0 %v1014
    %1062 = vmatprep.subr.mxu0 0.0
    %1063 = vmatpush2.msra.mxu0 0.0
    %1064 = vmatprep.subr.mxu0 0.0
    %1065 = vmatpush2.msra.mxu0 0.0
    %1066 = vmatprep.subr.mxu0 0.0
    %1067 = vmatpush2.msra.mxu0 0.0
    %1068 = vmatprep.subr.mxu0 0.0
    %1069 = vmatpush2.msra.mxu0 0.0
    %1070 = vmatprep.subr.mxu0 0.0
    %1071 = vmatpush2.msra.mxu0 0.0
    %1072 = vmatprep.subr.mxu0 0.0
    %1073 = vmatpush2.msra.mxu0 0.0
    %1074 = vmatprep.subr.mxu0 0.0
    %1075 = vmatpush2.msra.mxu0 0.0
    %1076 = vmatprep.subr.mxu0 0.0
    %1077 = vmatpush2.msra.mxu0 0.0
    %1078 = vmatprep.subr.mxu0 0.0
    %1079 = vmatpush2.msra.mxu0 0.0
    %1080 = vmatprep.subr.mxu0 0.0
    %1081 = vmatpush2.msra.mxu0 0.0
    %1082 = vmatprep.subr.mxu0 0.0
    %1083 = vmatpush2.msra.mxu0 0.0
    %1084 = vmatprep.subr.mxu0 0.0
    %1085 = vmatpush2.msra.mxu0 0.0
    %1086 = vmatprep.subr.mxu0 0.0
    %1087 = vmatpush2.msra.mxu0 0.0
    %1088 = vmatprep.subr.mxu0 0.0
    %1089 = vmatpush2.msra.mxu0 0.0
    %1090 = vmatprep.subr.mxu0 0.0
    %1091 = vmatpush2.msra.mxu0 0.0
    %1092 = vmatprep.subr.mxu0 0.0
    %1093 = vmatpush2.msra.mxu0 0.0
    %1094 = vmatprep.mubr.f32.mxu0 0.0
    %1095 = vmatmul.mubr.f32.gmra.mxu0 %v1011
    %v1096 = vpop.f32.mrf.mxu0
    %v1097 = vadd.f32 0.0, %v1096
    %v1098 = vpop.f32.mrf.mxu0
    %1099 = vmatprep.mubr.f32.mxu0 0.0
    %1100 = vmatmul.mubr.f32.gmra.mxu0 %v1012
    %v1101 = vpop.f32.mrf.mxu0
    %v1102 = vadd.f32 0.0, %v1101
    %v1103 = vpop.f32.mrf.mxu0
    %1104 = vdwg.mxu0
    %1105 = vmatprep.subr.mxu0 0.0
    %1106 = vmatpush1.msra.mxu0 %v1010
    %1107 = vmatprep.subr.mxu0 0.0
    %1108 = vmatpush1.msra.mxu0 %v1009
    %1109 = vmatprep.subr.mxu0 0.0
    %1110 = vmatpush1.msra.mxu0 %v1008
    %1111 = vmatprep.subr.mxu0 0.0
    %1112 = vmatpush1.msra.mxu0 %v1007
    %1113 = vmatprep.subr.mxu0 0.0
    %1114 = vmatpush1.msra.mxu0 %v1006
    %1115 = vmatprep.subr.mxu0 0.0
    %1116 = vmatpush1.msra.mxu0 %v1005
    %1117 = vmatprep.subr.mxu0 0.0
    %1118 = vmatpush1.msra.mxu0 %v1004
    %1119 = vmatprep.subr.mxu0 0.0
    %1120 = vmatpush1.msra.mxu0 %v1003
    %1121 = vmatprep.subr.mxu0 0.0
    %1122 = vmatpush1.msra.mxu0 %v1002
    %1123 = vmatprep.subr.mxu0 0.0
    %1124 = vmatpush1.msra.mxu0 %v1001
    %1125 = vmatprep.subr.mxu0 0.0
    %1126 = vmatpush1.msra.mxu0 %v1000
    %1127 = vmatprep.subr.mxu0 0.0
    %1128 = vmatpush1.msra.mxu0 %v999
    %1129 = vmatprep.subr.mxu0 0.0
    %1130 = vmatpush1.msra.mxu0 %v998
    %1131 = vmatprep.subr.mxu0 0.0
    %1132 = vmatpush1.msra.mxu0 %v997
    %1133 = vmatprep.subr.mxu0 0.0
    %1134 = vmatpush1.msra.mxu0 %v996
    %1135 = vmatprep.subr.mxu0 0.0
    %1136 = vmatpush1.msra.mxu0 %v995
    %1137 = vmatprep.subr.mxu0 0.0
    %1138 = vmatpush2.msra.mxu0 0.0
    %1139 = vmatprep.subr.mxu0 0.0
    %1140 = vmatpush2.msra.mxu0 0.0
    %1141 = vmatprep.subr.mxu0 0.0
    %1142 = vmatpush2.msra.mxu0 0.0
    %1143 = vmatprep.subr.mxu0 0.0
    %1144 = vmatpush2.msra.mxu0 0.0
    %1145 = vmatprep.subr.mxu0 0.0
    %1146 = vmatpush2.msra.mxu0 0.0
    %1147 = vmatprep.subr.mxu0 0.0
    %1148 = vmatpush2.msra.mxu0 0.0
    %1149 = vmatprep.subr.mxu0 0.0
    %1150 = vmatpush2.msra.mxu0 0.0
    %1151 = vmatprep.subr.mxu0 0.0
    %1152 = vmatpush2.msra.mxu0 0.0
    %1153 = vmatprep.subr.mxu0 0.0
    %1154 = vmatpush2.msra.mxu0 0.0
    %1155 = vmatprep.subr.mxu0 0.0
    %1156 = vmatpush2.msra.mxu0 0.0
    %1157 = vmatprep.subr.mxu0 0.0
    %1158 = vmatpush2.msra.mxu0 0.0
    %1159 = vmatprep.subr.mxu0 0.0
    %1160 = vmatpush2.msra.mxu0 0.0
    %1161 = vmatprep.subr.mxu0 0.0
    %1162 = vmatpush2.msra.mxu0 0.0
    %1163 = vmatprep.subr.mxu0 0.0
    %1164 = vmatpush2.msra.mxu0 0.0
    %1165 = vmatprep.subr.mxu0 0.0
    %1166 = vmatpush2.msra.mxu0 0.0
    %1167 = vmatprep.subr.mxu0 0.0
    %1168 = vmatpush2.msra.mxu0 0.0
    %1169 = vmatprep.mubr.f32.mxu0 0.0
    %1170 = vmatmul.mubr.f32.gmra.mxu0 %v993
    %v1171 = vpop.f32.mrf.mxu0
    %v1172 = vadd.f32 %v1097, %v1171
    %v1173 = vpop.f32.mrf.mxu0
    %1174 = vmatprep.mubr.f32.mxu0 0.0
    %1175 = vmatmul.mubr.f32.gmra.mxu0 %v994
    %v1176 = vpop.f32.mrf.mxu0
    %v1177 = vadd.f32 %v1102, %v1176
    %v1178 = vpop.f32.mrf.mxu0
    %1179 = vdwg.mxu0
    %v1180 = vld [vmem:[#allocation3 + $0x2] sm:$0xff]
    %v1181 = vld [vmem:[#allocation3 + $0xa] sm:$0xff]
    %s1182 = scalar_lea.vmem [#allocation7], 256
    %v1183 = vld [vmem:[%s1182] sm:$0xff]
    %v1184 = vld [vmem:[%s1182 + $0x8] sm:$0xff]
    %v1185 = vld [vmem:[%s1182 + $0x10] sm:$0xff]
    %v1186 = vld [vmem:[%s1182 + $0x18] sm:$0xff]
    %v1187 = vld [vmem:[%s1182 + $0x20] sm:$0xff]
    %v1188 = vld [vmem:[%s1182 + $0x28] sm:$0xff]
    %v1189 = vld [vmem:[%s1182 + $0x30] sm:$0xff]
    %v1190 = vld [vmem:[%s1182 + $0x38] sm:$0xff]
    %v1191 = vld [vmem:[%s1182 + $0x40] sm:$0xff]
    %v1192 = vld [vmem:[%s1182 + $0x48] sm:$0xff]
    %v1193 = vld [vmem:[%s1182 + $0x50] sm:$0xff]
    %v1194 = vld [vmem:[%s1182 + $0x58] sm:$0xff]
    %v1195 = vld [vmem:[%s1182 + $0x60] sm:$0xff]
    %v1196 = vld [vmem:[%s1182 + $0x68] sm:$0xff]
    %v1197 = vld [vmem:[%s1182 + $0x70] sm:$0xff]
    %v1198 = vld [vmem:[%s1182 + $0x78] sm:$0xff]
    %1199 = vmatprep.subr.mxu0 0.0
    %1200 = vmatpush1.msra.mxu0 %v1198
    %1201 = vmatprep.subr.mxu0 0.0
    %1202 = vmatpush1.msra.mxu0 %v1197
    %1203 = vmatprep.subr.mxu0 0.0
    %1204 = vmatpush1.msra.mxu0 %v1196
    %1205 = vmatprep.subr.mxu0 0.0
    %1206 = vmatpush1.msra.mxu0 %v1195
    %1207 = vmatprep.subr.mxu0 0.0
    %1208 = vmatpush1.msra.mxu0 %v1194
    %1209 = vmatprep.subr.mxu0 0.0
    %1210 = vmatpush1.msra.mxu0 %v1193
    %1211 = vmatprep.subr.mxu0 0.0
    %1212 = vmatpush1.msra.mxu0 %v1192
    %1213 = vmatprep.subr.mxu0 0.0
    %1214 = vmatpush1.msra.mxu0 %v1191
    %1215 = vmatprep.subr.mxu0 0.0
    %1216 = vmatpush1.msra.mxu0 %v1190
    %1217 = vmatprep.subr.mxu0 0.0
    %1218 = vmatpush1.msra.mxu0 %v1189
    %1219 = vmatprep.subr.mxu0 0.0
    %1220 = vmatpush1.msra.mxu0 %v1188
    %1221 = vmatprep.subr.mxu0 0.0
    %1222 = vmatpush1.msra.mxu0 %v1187
    %1223 = vmatprep.subr.mxu0 0.0
    %1224 = vmatpush1.msra.mxu0 %v1186
    %1225 = vmatprep.subr.mxu0 0.0
    %1226 = vmatpush1.msra.mxu0 %v1185
    %1227 = vmatprep.subr.mxu0 0.0
    %1228 = vmatpush1.msra.mxu0 %v1184
    %1229 = vmatprep.subr.mxu0 0.0
    %1230 = vmatpush1.msra.mxu0 %v1183
    %1231 = vmatprep.subr.mxu0 0.0
    %1232 = vmatpush2.msra.mxu0 0.0
    %1233 = vmatprep.subr.mxu0 0.0
    %1234 = vmatpush2.msra.mxu0 0.0
    %1235 = vmatprep.subr.mxu0 0.0
    %1236 = vmatpush2.msra.mxu0 0.0
    %1237 = vmatprep.subr.mxu0 0.0
    %1238 = vmatpush2.msra.mxu0 0.0
    %1239 = vmatprep.subr.mxu0 0.0
    %1240 = vmatpush2.msra.mxu0 0.0
    %1241 = vmatprep.subr.mxu0 0.0
    %1242 = vmatpush2.msra.mxu0 0.0
    %1243 = vmatprep.subr.mxu0 0.0
    %1244 = vmatpush2.msra.mxu0 0.0
    %1245 = vmatprep.subr.mxu0 0.0
    %1246 = vmatpush2.msra.mxu0 0.0
    %1247 = vmatprep.subr.mxu0 0.0
    %1248 = vmatpush2.msra.mxu0 0.0
    %1249 = vmatprep.subr.mxu0 0.0
    %1250 = vmatpush2.msra.mxu0 0.0
    %1251 = vmatprep.subr.mxu0 0.0
    %1252 = vmatpush2.msra.mxu0 0.0
    %1253 = vmatprep.subr.mxu0 0.0
    %1254 = vmatpush2.msra.mxu0 0.0
    %1255 = vmatprep.subr.mxu0 0.0
    %1256 = vmatpush2.msra.mxu0 0.0
    %1257 = vmatprep.subr.mxu0 0.0
    %1258 = vmatpush2.msra.mxu0 0.0
    %1259 = vmatprep.subr.mxu0 0.0
    %1260 = vmatpush2.msra.mxu0 0.0
    %1261 = vmatprep.subr.mxu0 0.0
    %1262 = vmatpush2.msra.mxu0 0.0
    %1263 = vmatprep.mubr.f32.mxu0 0.0
    %1264 = vmatmul.mubr.f32.gmra.mxu0 %v1180
    %v1265 = vpop.f32.mrf.mxu0
    %v1266 = vadd.f32 0.0, %v1265
    %v1267 = vpop.f32.mrf.mxu0
    %1268 = vmatprep.mubr.f32.mxu0 0.0
    %1269 = vmatmul.mubr.f32.gmra.mxu0 %v1181
    %v1270 = vpop.f32.mrf.mxu0
    %v1271 = vadd.f32 0.0, %v1270
    %v1272 = vpop.f32.mrf.mxu0
    %1273 = vdwg.mxu0
    %v1274 = vadd.f32 %v1172, %v1266
    %v1275 = vadd.f32 %v1177, %v1271
    %v1276 = vld [vmem:[#allocation3 + $0x12] sm:$0xff]
    %v1277 = vld [vmem:[#allocation3 + $0x1a] sm:$0xff]
    %v1278 = vld [vmem:[#allocation3 + $0x13] sm:$0xff]
    %v1279 = vld [vmem:[#allocation3 + $0x1b] sm:$0xff]
    %1280 = vmatprep.subr.mxu0 0.0
    %1281 = vmatpush1.msra.mxu0 %v1029
    %1282 = vmatprep.subr.mxu0 0.0
    %1283 = vmatpush1.msra.mxu0 %v1028
    %1284 = vmatprep.subr.mxu0 0.0
    %1285 = vmatpush1.msra.mxu0 %v1027
    %1286 = vmatprep.subr.mxu0 0.0
    %1287 = vmatpush1.msra.mxu0 %v1026
    %1288 = vmatprep.subr.mxu0 0.0
    %1289 = vmatpush1.msra.mxu0 %v1025
    %1290 = vmatprep.subr.mxu0 0.0
    %1291 = vmatpush1.msra.mxu0 %v1024
    %1292 = vmatprep.subr.mxu0 0.0
    %1293 = vmatpush1.msra.mxu0 %v1023
    %1294 = vmatprep.subr.mxu0 0.0
    %1295 = vmatpush1.msra.mxu0 %v1022
    %1296 = vmatprep.subr.mxu0 0.0
    %1297 = vmatpush1.msra.mxu0 %v1021
    %1298 = vmatprep.subr.mxu0 0.0
    %1299 = vmatpush1.msra.mxu0 %v1020
    %1300 = vmatprep.subr.mxu0 0.0
    %1301 = vmatpush1.msra.mxu0 %v1019
    %1302 = vmatprep.subr.mxu0 0.0
    %1303 = vmatpush1.msra.mxu0 %v1018
    %1304 = vmatprep.subr.mxu0 0.0
    %1305 = vmatpush1.msra.mxu0 %v1017
    %1306 = vmatprep.subr.mxu0 0.0
    %1307 = vmatpush1.msra.mxu0 %v1016
    %1308 = vmatprep.subr.mxu0 0.0
    %1309 = vmatpush1.msra.mxu0 %v1015
    %1310 = vmatprep.subr.mxu0 0.0
    %1311 = vmatpush1.msra.mxu0 %v1014
    %1312 = vmatprep.subr.mxu0 0.0
    %1313 = vmatpush2.msra.mxu0 0.0
    %1314 = vmatprep.subr.mxu0 0.0
    %1315 = vmatpush2.msra.mxu0 0.0
    %1316 = vmatprep.subr.mxu0 0.0
    %1317 = vmatpush2.msra.mxu0 0.0
    %1318 = vmatprep.subr.mxu0 0.0
    %1319 = vmatpush2.msra.mxu0 0.0
    %1320 = vmatprep.subr.mxu0 0.0
    %1321 = vmatpush2.msra.mxu0 0.0
    %1322 = vmatprep.subr.mxu0 0.0
    %1323 = vmatpush2.msra.mxu0 0.0
    %1324 = vmatprep.subr.mxu0 0.0
    %1325 = vmatpush2.msra.mxu0 0.0
    %1326 = vmatprep.subr.mxu0 0.0
    %1327 = vmatpush2.msra.mxu0 0.0
    %1328 = vmatprep.subr.mxu0 0.0
    %1329 = vmatpush2.msra.mxu0 0.0
    %1330 = vmatprep.subr.mxu0 0.0
    %1331 = vmatpush2.msra.mxu0 0.0
    %1332 = vmatprep.subr.mxu0 0.0
    %1333 = vmatpush2.msra.mxu0 0.0
    %1334 = vmatprep.subr.mxu0 0.0
    %1335 = vmatpush2.msra.mxu0 0.0
    %1336 = vmatprep.subr.mxu0 0.0
    %1337 = vmatpush2.msra.mxu0 0.0
    %1338 = vmatprep.subr.mxu0 0.0
    %1339 = vmatpush2.msra.mxu0 0.0
    %1340 = vmatprep.subr.mxu0 0.0
    %1341 = vmatpush2.msra.mxu0 0.0
    %1342 = vmatprep.subr.mxu0 0.0
    %1343 = vmatpush2.msra.mxu0 0.0
    %1344 = vmatprep.mubr.f32.mxu0 0.0
    %1345 = vmatmul.mubr.f32.gmra.mxu0 %v1278
    %v1346 = vpop.f32.mrf.mxu0
    %v1347 = vadd.f32 0.0, %v1346
    %v1348 = vpop.f32.mrf.mxu0
    %1349 = vmatprep.mubr.f32.mxu0 0.0
    %1350 = vmatmul.mubr.f32.gmra.mxu0 %v1279
    %v1351 = vpop.f32.mrf.mxu0
    %v1352 = vadd.f32 0.0, %v1351
    %v1353 = vpop.f32.mrf.mxu0
    %1354 = vdwg.mxu0
    %1355 = vmatprep.subr.mxu0 0.0
    %1356 = vmatpush1.msra.mxu0 %v1010
    %1357 = vmatprep.subr.mxu0 0.0
    %1358 = vmatpush1.msra.mxu0 %v1009
    %1359 = vmatprep.subr.mxu0 0.0
    %1360 = vmatpush1.msra.mxu0 %v1008
    %1361 = vmatprep.subr.mxu0 0.0
    %1362 = vmatpush1.msra.mxu0 %v1007
    %1363 = vmatprep.subr.mxu0 0.0
    %1364 = vmatpush1.msra.mxu0 %v1006
    %1365 = vmatprep.subr.mxu0 0.0
    %1366 = vmatpush1.msra.mxu0 %v1005
    %1367 = vmatprep.subr.mxu0 0.0
    %1368 = vmatpush1.msra.mxu0 %v1004
    %1369 = vmatprep.subr.mxu0 0.0
    %1370 = vmatpush1.msra.mxu0 %v1003
    %1371 = vmatprep.subr.mxu0 0.0
    %1372 = vmatpush1.msra.mxu0 %v1002
    %1373 = vmatprep.subr.mxu0 0.0
    %1374 = vmatpush1.msra.mxu0 %v1001
    %1375 = vmatprep.subr.mxu0 0.0
    %1376 = vmatpush1.msra.mxu0 %v1000
    %1377 = vmatprep.subr.mxu0 0.0
    %1378 = vmatpush1.msra.mxu0 %v999
    %1379 = vmatprep.subr.mxu0 0.0
    %1380 = vmatpush1.msra.mxu0 %v998
    %1381 = vmatprep.subr.mxu0 0.0
    %1382 = vmatpush1.msra.mxu0 %v997
    %1383 = vmatprep.subr.mxu0 0.0
    %1384 = vmatpush1.msra.mxu0 %v996
    %1385 = vmatprep.subr.mxu0 0.0
    %1386 = vmatpush1.msra.mxu0 %v995
    %1387 = vmatprep.subr.mxu0 0.0
    %1388 = vmatpush2.msra.mxu0 0.0
    %1389 = vmatprep.subr.mxu0 0.0
    %1390 = vmatpush2.msra.mxu0 0.0
    %1391 = vmatprep.subr.mxu0 0.0
    %1392 = vmatpush2.msra.mxu0 0.0
    %1393 = vmatprep.subr.mxu0 0.0
    %1394 = vmatpush2.msra.mxu0 0.0
    %1395 = vmatprep.subr.mxu0 0.0
    %1396 = vmatpush2.msra.mxu0 0.0
    %1397 = vmatprep.subr.mxu0 0.0
    %1398 = vmatpush2.msra.mxu0 0.0
    %1399 = vmatprep.subr.mxu0 0.0
    %1400 = vmatpush2.msra.mxu0 0.0
    %1401 = vmatprep.subr.mxu0 0.0
    %1402 = vmatpush2.msra.mxu0 0.0
    %1403 = vmatprep.subr.mxu0 0.0
    %1404 = vmatpush2.msra.mxu0 0.0
    %1405 = vmatprep.subr.mxu0 0.0
    %1406 = vmatpush2.msra.mxu0 0.0
    %1407 = vmatprep.subr.mxu0 0.0
    %1408 = vmatpush2.msra.mxu0 0.0
    %1409 = vmatprep.subr.mxu0 0.0
    %1410 = vmatpush2.msra.mxu0 0.0
    %1411 = vmatprep.subr.mxu0 0.0
    %1412 = vmatpush2.msra.mxu0 0.0
    %1413 = vmatprep.subr.mxu0 0.0
    %1414 = vmatpush2.msra.mxu0 0.0
    %1415 = vmatprep.subr.mxu0 0.0
    %1416 = vmatpush2.msra.mxu0 0.0
    %1417 = vmatprep.subr.mxu0 0.0
    %1418 = vmatpush2.msra.mxu0 0.0
    %1419 = vmatprep.mubr.f32.mxu0 0.0
    %1420 = vmatmul.mubr.f32.gmra.mxu0 %v1276
    %v1421 = vpop.f32.mrf.mxu0
    %v1422 = vadd.f32 %v1347, %v1421
    %v1423 = vpop.f32.mrf.mxu0
    %1424 = vmatprep.mubr.f32.mxu0 0.0
    %1425 = vmatmul.mubr.f32.gmra.mxu0 %v1277
    %v1426 = vpop.f32.mrf.mxu0
    %v1427 = vadd.f32 %v1352, %v1426
    %v1428 = vpop.f32.mrf.mxu0
    %1429 = vdwg.mxu0
    %v1430 = vld [vmem:[#allocation3 + $0x14] sm:$0xff]
    %v1431 = vld [vmem:[#allocation3 + $0x1c] sm:$0xff]
    %1432 = vmatprep.subr.mxu0 0.0
    %1433 = vmatpush1.msra.mxu0 %v1198
    %1434 = vmatprep.subr.mxu0 0.0
    %1435 = vmatpush1.msra.mxu0 %v1197
    %1436 = vmatprep.subr.mxu0 0.0
    %1437 = vmatpush1.msra.mxu0 %v1196
    %1438 = vmatprep.subr.mxu0 0.0
    %1439 = vmatpush1.msra.mxu0 %v1195
    %1440 = vmatprep.subr.mxu0 0.0
    %1441 = vmatpush1.msra.mxu0 %v1194
    %1442 = vmatprep.subr.mxu0 0.0
    %1443 = vmatpush1.msra.mxu0 %v1193
    %1444 = vmatprep.subr.mxu0 0.0
    %1445 = vmatpush1.msra.mxu0 %v1192
    %1446 = vmatprep.subr.mxu0 0.0
    %1447 = vmatpush1.msra.mxu0 %v1191
    %1448 = vmatprep.subr.mxu0 0.0
    %1449 = vmatpush1.msra.mxu0 %v1190
    %1450 = vmatprep.subr.mxu0 0.0
    %1451 = vmatpush1.msra.mxu0 %v1189
    %1452 = vmatprep.subr.mxu0 0.0
    %1453 = vmatpush1.msra.mxu0 %v1188
    %1454 = vmatprep.subr.mxu0 0.0
    %1455 = vmatpush1.msra.mxu0 %v1187
    %1456 = vmatprep.subr.mxu0 0.0
    %1457 = vmatpush1.msra.mxu0 %v1186
    %1458 = vmatprep.subr.mxu0 0.0
    %1459 = vmatpush1.msra.mxu0 %v1185
    %1460 = vmatprep.subr.mxu0 0.0
    %1461 = vmatpush1.msra.mxu0 %v1184
    %1462 = vmatprep.subr.mxu0 0.0
    %1463 = vmatpush1.msra.mxu0 %v1183
    %1464 = vmatprep.subr.mxu0 0.0
    %1465 = vmatpush2.msra.mxu0 0.0
    %1466 = vmatprep.subr.mxu0 0.0
    %1467 = vmatpush2.msra.mxu0 0.0
    %1468 = vmatprep.subr.mxu0 0.0
    %1469 = vmatpush2.msra.mxu0 0.0
    %1470 = vmatprep.subr.mxu0 0.0
    %1471 = vmatpush2.msra.mxu0 0.0
    %1472 = vmatprep.subr.mxu0 0.0
    %1473 = vmatpush2.msra.mxu0 0.0
    %1474 = vmatprep.subr.mxu0 0.0
    %1475 = vmatpush2.msra.mxu0 0.0
    %1476 = vmatprep.subr.mxu0 0.0
    %1477 = vmatpush2.msra.mxu0 0.0
    %1478 = vmatprep.subr.mxu0 0.0
    %1479 = vmatpush2.msra.mxu0 0.0
    %1480 = vmatprep.subr.mxu0 0.0
    %1481 = vmatpush2.msra.mxu0 0.0
    %1482 = vmatprep.subr.mxu0 0.0
    %1483 = vmatpush2.msra.mxu0 0.0
    %1484 = vmatprep.subr.mxu0 0.0
    %1485 = vmatpush2.msra.mxu0 0.0
    %1486 = vmatprep.subr.mxu0 0.0
    %1487 = vmatpush2.msra.mxu0 0.0
    %1488 = vmatprep.subr.mxu0 0.0
    %1489 = vmatpush2.msra.mxu0 0.0
    %1490 = vmatprep.subr.mxu0 0.0
    %1491 = vmatpush2.msra.mxu0 0.0
    %1492 = vmatprep.subr.mxu0 0.0
    %1493 = vmatpush2.msra.mxu0 0.0
    %1494 = vmatprep.subr.mxu0 0.0
    %1495 = vmatpush2.msra.mxu0 0.0
    %1496 = vmatprep.mubr.f32.mxu0 0.0
    %1497 = vmatmul.mubr.f32.gmra.mxu0 %v1430
    %v1498 = vpop.f32.mrf.mxu0
    %v1499 = vadd.f32 0.0, %v1498
    %v1500 = vpop.f32.mrf.mxu0
    %1501 = vmatprep.mubr.f32.mxu0 0.0
    %1502 = vmatmul.mubr.f32.gmra.mxu0 %v1431
    %v1503 = vpop.f32.mrf.mxu0
    %v1504 = vadd.f32 0.0, %v1503
    %v1505 = vpop.f32.mrf.mxu0
    %1506 = vdwg.mxu0
    %v1507 = vadd.f32 %v1422, %v1499
    %v1508 = vadd.f32 %v1427, %v1504
    %v1509 = vadd.f32 %v1274, %v1275
    %v1510 = vrot.slane %v1509, 4
    %v1511 = vadd.f32 %v1509, %v1510
    %v1512 = vrot.slane %v1511, 2
    %v1513 = vadd.f32 %v1511, %v1512
    %v1514 = vrot.slane %v1513, 1
    %v1515 = vadd.f32 %v1513, %v1514
    %v1516 = vadd.f32 %v1515, 0.0
    %v1517 = vmul.f32 %v1274, %v1274
    %v1518 = vmul.f32 %v1275, %v1275
    %v1519 = vadd.f32 %v1517, %v1518
    %v1520 = vrot.slane %v1519, 4
    %v1521 = vadd.f32 %v1519, %v1520
    %v1522 = vrot.slane %v1521, 2
    %v1523 = vadd.f32 %v1521, %v1522
    %v1524 = vrot.slane %v1523, 1
    %v1525 = vadd.f32 %v1523, %v1524
    %v1526 = vadd.f32 %v1525, 0.0
    %v1527 = vadd.f32 %v1507, %v1508
    %v1528 = vrot.slane %v1527, 4
    %v1529 = vadd.f32 %v1527, %v1528
    %v1530 = vrot.slane %v1529, 2
    %v1531 = vadd.f32 %v1529, %v1530
    %v1532 = vrot.slane %v1531, 1
    %v1533 = vadd.f32 %v1531, %v1532
    %v1534 = vadd.f32 %v1516, %v1533
    %v1535 = vmul.f32 %v1507, %v1507
    %v1536 = vmul.f32 %v1508, %v1508
    %v1537 = vadd.f32 %v1535, %v1536
    %v1538 = vrot.slane %v1537, 4
    %v1539 = vadd.f32 %v1537, %v1538
    %v1540 = vrot.slane %v1539, 2
    %v1541 = vadd.f32 %v1539, %v1540
    %v1542 = vrot.slane %v1541, 1
    %v1543 = vadd.f32 %v1541, %v1542
    %v1544 = vadd.f32 %v1526, %v1543
    %v1545 = vld [vmem:[%s1] sm:$0xff]
    %v1546 = vld [vmem:[%s1 + $0x8] sm:$0xff]
    %v1547 = vld [vmem:[%s1 + $0x10] sm:$0xff]
    %v1548 = vld [vmem:[%s1 + $0x18] sm:$0xff]
    %v1549 = vld [vmem:[%s1 + $0x20] sm:$0xff]
    %v1550 = vld [vmem:[%s1 + $0x28] sm:$0xff]
    %v1551 = vld [vmem:[%s1 + $0x30] sm:$0xff]
    %v1552 = vld [vmem:[%s1 + $0x38] sm:$0xff]
    %v1553 = vld [vmem:[%s1 + $0x40] sm:$0xff]
    %v1554 = vld [vmem:[%s1 + $0x48] sm:$0xff]
    %v1555 = vld [vmem:[%s1 + $0x50] sm:$0xff]
    %v1556 = vld [vmem:[%s1 + $0x58] sm:$0xff]
    %v1557 = vld [vmem:[%s1 + $0x60] sm:$0xff]
    %v1558 = vld [vmem:[%s1 + $0x68] sm:$0xff]
    %v1559 = vld [vmem:[%s1 + $0x70] sm:$0xff]
    %v1560 = vld [vmem:[%s1 + $0x78] sm:$0xff]
    %1561 = vmatprep.subr.mxu0 0.0
    %1562 = vmatpush1.msra.mxu0 %v1560
    %1563 = vmatprep.subr.mxu0 0.0
    %1564 = vmatpush1.msra.mxu0 %v1559
    %1565 = vmatprep.subr.mxu0 0.0
    %1566 = vmatpush1.msra.mxu0 %v1558
    %1567 = vmatprep.subr.mxu0 0.0
    %1568 = vmatpush1.msra.mxu0 %v1557
    %1569 = vmatprep.subr.mxu0 0.0
    %1570 = vmatpush1.msra.mxu0 %v1556
    %1571 = vmatprep.subr.mxu0 0.0
    %1572 = vmatpush1.msra.mxu0 %v1555
    %1573 = vmatprep.subr.mxu0 0.0
    %1574 = vmatpush1.msra.mxu0 %v1554
    %1575 = vmatprep.subr.mxu0 0.0
    %1576 = vmatpush1.msra.mxu0 %v1553
    %1577 = vmatprep.subr.mxu0 0.0
    %1578 = vmatpush1.msra.mxu0 %v1552
    %1579 = vmatprep.subr.mxu0 0.0
    %1580 = vmatpush1.msra.mxu0 %v1551
    %1581 = vmatprep.subr.mxu0 0.0
    %1582 = vmatpush1.msra.mxu0 %v1550
    %1583 = vmatprep.subr.mxu0 0.0
    %1584 = vmatpush1.msra.mxu0 %v1549
    %1585 = vmatprep.subr.mxu0 0.0
    %1586 = vmatpush1.msra.mxu0 %v1548
    %1587 = vmatprep.subr.mxu0 0.0
    %1588 = vmatpush1.msra.mxu0 %v1547
    %1589 = vmatprep.subr.mxu0 0.0
    %1590 = vmatpush1.msra.mxu0 %v1546
    %1591 = vmatprep.subr.mxu0 0.0
    %1592 = vmatpush1.msra.mxu0 %v1545
    %1593 = vmatprep.subr.mxu0 0.0
    %1594 = vmatpush2.msra.mxu0 0.0
    %1595 = vmatprep.subr.mxu0 0.0
    %1596 = vmatpush2.msra.mxu0 0.0
    %1597 = vmatprep.subr.mxu0 0.0
    %1598 = vmatpush2.msra.mxu0 0.0
    %1599 = vmatprep.subr.mxu0 0.0
    %1600 = vmatpush2.msra.mxu0 0.0
    %1601 = vmatprep.subr.mxu0 0.0
    %1602 = vmatpush2.msra.mxu0 0.0
    %1603 = vmatprep.subr.mxu0 0.0
    %1604 = vmatpush2.msra.mxu0 0.0
    %1605 = vmatprep.subr.mxu0 0.0
    %1606 = vmatpush2.msra.mxu0 0.0
    %1607 = vmatprep.subr.mxu0 0.0
    %1608 = vmatpush2.msra.mxu0 0.0
    %1609 = vmatprep.subr.mxu0 0.0
    %1610 = vmatpush2.msra.mxu0 0.0
    %1611 = vmatprep.subr.mxu0 0.0
    %1612 = vmatpush2.msra.mxu0 0.0
    %1613 = vmatprep.subr.mxu0 0.0
    %1614 = vmatpush2.msra.mxu0 0.0
    %1615 = vmatprep.subr.mxu0 0.0
    %1616 = vmatpush2.msra.mxu0 0.0
    %1617 = vmatprep.subr.mxu0 0.0
    %1618 = vmatpush2.msra.mxu0 0.0
    %1619 = vmatprep.subr.mxu0 0.0
    %1620 = vmatpush2.msra.mxu0 0.0
    %1621 = vmatprep.subr.mxu0 0.0
    %1622 = vmatpush2.msra.mxu0 0.0
    %1623 = vmatprep.subr.mxu0 0.0
    %1624 = vmatpush2.msra.mxu0 0.0
    %1625 = vmatprep.mubr.f32.mxu0 0.0
    %1626 = vmatmul.mubr.f32.gmra.mxu0 %v1534
    %v1627 = vpop.f32.mrf.mxu0
    %v1628 = vadd.f32 0.0, %v1627
    %v1629 = vpop.f32.mrf.mxu0
    %1630 = vdwg.mxu0
    %1631 = vmatprep.subr.mxu0 0.0
    %1632 = vmatpush1.msra.mxu0 %v1560
    %1633 = vmatprep.subr.mxu0 0.0
    %1634 = vmatpush1.msra.mxu0 %v1559
    %1635 = vmatprep.subr.mxu0 0.0
    %1636 = vmatpush1.msra.mxu0 %v1558
    %1637 = vmatprep.subr.mxu0 0.0
    %1638 = vmatpush1.msra.mxu0 %v1557
    %1639 = vmatprep.subr.mxu0 0.0
    %1640 = vmatpush1.msra.mxu0 %v1556
    %1641 = vmatprep.subr.mxu0 0.0
    %1642 = vmatpush1.msra.mxu0 %v1555
    %1643 = vmatprep.subr.mxu0 0.0
    %1644 = vmatpush1.msra.mxu0 %v1554
    %1645 = vmatprep.subr.mxu0 0.0
    %1646 = vmatpush1.msra.mxu0 %v1553
    %1647 = vmatprep.subr.mxu0 0.0
    %1648 = vmatpush1.msra.mxu0 %v1552
    %1649 = vmatprep.subr.mxu0 0.0
    %1650 = vmatpush1.msra.mxu0 %v1551
    %1651 = vmatprep.subr.mxu0 0.0
    %1652 = vmatpush1.msra.mxu0 %v1550
    %1653 = vmatprep.subr.mxu0 0.0
    %1654 = vmatpush1.msra.mxu0 %v1549
    %1655 = vmatprep.subr.mxu0 0.0
    %1656 = vmatpush1.msra.mxu0 %v1548
    %1657 = vmatprep.subr.mxu0 0.0
    %1658 = vmatpush1.msra.mxu0 %v1547
    %1659 = vmatprep.subr.mxu0 0.0
    %1660 = vmatpush1.msra.mxu0 %v1546
    %1661 = vmatprep.subr.mxu0 0.0
    %1662 = vmatpush1.msra.mxu0 %v1545
    %1663 = vmatprep.subr.mxu0 0.0
    %1664 = vmatpush2.msra.mxu0 0.0
    %1665 = vmatprep.subr.mxu0 0.0
    %1666 = vmatpush2.msra.mxu0 0.0
    %1667 = vmatprep.subr.mxu0 0.0
    %1668 = vmatpush2.msra.mxu0 0.0
    %1669 = vmatprep.subr.mxu0 0.0
    %1670 = vmatpush2.msra.mxu0 0.0
    %1671 = vmatprep.subr.mxu0 0.0
    %1672 = vmatpush2.msra.mxu0 0.0
    %1673 = vmatprep.subr.mxu0 0.0
    %1674 = vmatpush2.msra.mxu0 0.0
    %1675 = vmatprep.subr.mxu0 0.0
    %1676 = vmatpush2.msra.mxu0 0.0
    %1677 = vmatprep.subr.mxu0 0.0
    %1678 = vmatpush2.msra.mxu0 0.0
    %1679 = vmatprep.subr.mxu0 0.0
    %1680 = vmatpush2.msra.mxu0 0.0
    %1681 = vmatprep.subr.mxu0 0.0
    %1682 = vmatpush2.msra.mxu0 0.0
    %1683 = vmatprep.subr.mxu0 0.0
    %1684 = vmatpush2.msra.mxu0 0.0
    %1685 = vmatprep.subr.mxu0 0.0
    %1686 = vmatpush2.msra.mxu0 0.0
    %1687 = vmatprep.subr.mxu0 0.0
    %1688 = vmatpush2.msra.mxu0 0.0
    %1689 = vmatprep.subr.mxu0 0.0
    %1690 = vmatpush2.msra.mxu0 0.0
    %1691 = vmatprep.subr.mxu0 0.0
    %1692 = vmatpush2.msra.mxu0 0.0
    %1693 = vmatprep.subr.mxu0 0.0
    %1694 = vmatpush2.msra.mxu0 0.0
    %1695 = vmatprep.mubr.f32.mxu0 0.0
    %1696 = vmatmul.mubr.f32.gmra.mxu0 %v1544
    %v1697 = vpop.f32.mrf.mxu0
    %v1698 = vadd.f32 0.0, %v1697
    %v1699 = vpop.f32.mrf.mxu0
    %1700 = vdwg.mxu0
    %v1701 = vmul.f32 %v1628, %v801
    %v1702 = vmul.f32 %v1698, %v801
    %v1703 = vmul.f32 %v1701, %v1701
    %v1704 = vsub.f32 %v1702, %v1703
    %v1705 = vld [vmem:[%s7] sm:$0x1]
    %v1706 = vadd.f32 %v1704, 1e-05
    %v1707 = vrsqrt.pop %v1706
    %v1708 = vmul.f32 %v1705, %v1707
    %v1709 = vld [vmem:[%s8] sm:$0x1]
    %v1710 = vmul.f32 %v1701, %v1708
    %v1711 = vsub.f32 %v1709, %v1710
    %v1712 = vld [vmem:[%s2] sm:$0xff]
    %v1714 = vsel %vm814, %v1708, 0
    %1716 = vmatprep.subr.mxu0 0.0
    %1717 = vmatpush1.msra.mxu0 0.0
    %1718 = vmatprep.subr.mxu0 0.0
    %1719 = vmatpush1.msra.mxu0 0.0
    %1720 = vmatprep.subr.mxu0 0.0
    %1721 = vmatpush1.msra.mxu0 0.0
    %1722 = vmatprep.subr.mxu0 0.0
    %1723 = vmatpush1.msra.mxu0 0.0
    %1724 = vmatprep.subr.mxu0 0.0
    %1725 = vmatpush1.msra.mxu0 0.0
    %1726 = vmatprep.subr.mxu0 0.0
    %1727 = vmatpush1.msra.mxu0 0.0
    %1728 = vmatprep.subr.mxu0 0.0
    %1729 = vmatpush1.msra.mxu0 0.0
    %1730 = vmatprep.subr.mxu0 0.0
    %1731 = vmatpush1.msra.mxu0 0.0
    %1732 = vmatprep.subr.mxu0 0.0
    %1733 = vmatpush1.msra.mxu0 0.0
    %1734 = vmatprep.subr.mxu0 0.0
    %1735 = vmatpush1.msra.mxu0 0.0
    %1736 = vmatprep.subr.mxu0 0.0
    %1737 = vmatpush1.msra.mxu0 0.0
    %1738 = vmatprep.subr.mxu0 0.0
    %1739 = vmatpush1.msra.mxu0 0.0
    %1740 = vmatprep.subr.mxu0 0.0
    %1741 = vmatpush1.msra.mxu0 0.0
    %1742 = vmatprep.subr.mxu0 0.0
    %1743 = vmatpush1.msra.mxu0 0.0
    %1744 = vmatprep.subr.mxu0 0.0
    %1745 = vmatpush1.msra.mxu0 0.0
    %1746 = vmatprep.subr.mxu0 0.0
    %1747 = vmatpush1.msra.mxu0 %v1712
    %1748 = vmatprep.subr.mxu0 0.0
    %1749 = vmatpush2.msra.mxu0 0.0
    %1750 = vmatprep.subr.mxu0 0.0
    %1751 = vmatpush2.msra.mxu0 0.0
    %1752 = vmatprep.subr.mxu0 0.0
    %1753 = vmatpush2.msra.mxu0 0.0
    %1754 = vmatprep.subr.mxu0 0.0
    %1755 = vmatpush2.msra.mxu0 0.0
    %1756 = vmatprep.subr.mxu0 0.0
    %1757 = vmatpush2.msra.mxu0 0.0
    %1758 = vmatprep.subr.mxu0 0.0
    %1759 = vmatpush2.msra.mxu0 0.0
    %1760 = vmatprep.subr.mxu0 0.0
    %1761 = vmatpush2.msra.mxu0 0.0
    %1762 = vmatprep.subr.mxu0 0.0
    %1763 = vmatpush2.msra.mxu0 0.0
    %1764 = vmatprep.subr.mxu0 0.0
    %1765 = vmatpush2.msra.mxu0 0.0
    %1766 = vmatprep.subr.mxu0 0.0
    %1767 = vmatpush2.msra.mxu0 0.0
    %1768 = vmatprep.subr.mxu0 0.0
    %1769 = vmatpush2.msra.mxu0 0.0
    %1770 = vmatprep.subr.mxu0 0.0
    %1771 = vmatpush2.msra.mxu0 0.0
    %1772 = vmatprep.subr.mxu0 0.0
    %1773 = vmatpush2.msra.mxu0 0.0
    %1774 = vmatprep.subr.mxu0 0.0
    %1775 = vmatpush2.msra.mxu0 0.0
    %1776 = vmatprep.subr.mxu0 0.0
    %1777 = vmatpush2.msra.mxu0 0.0
    %1778 = vmatprep.subr.mxu0 0.0
    %1779 = vmatpush2.msra.mxu0 0.0
    %1780 = vmatprep.mubr.f32.mxu0 0.0
    %1781 = vmatmul.mubr.f32.gmra.mxu0 %v1714
    %v1782 = vpop.f32.mrf.mxu0
    %v1783 = vadd.f32 0.0, %v1782
    %v1784 = vpop.f32.mrf.mxu0
    %1785 = vdwg.mxu0
    %v1787 = vsel %vm814, %v1711, 0
    %1789 = vmatprep.subr.mxu0 0.0
    %1790 = vmatpush1.msra.mxu0 0.0
    %1791 = vmatprep.subr.mxu0 0.0
    %1792 = vmatpush1.msra.mxu0 0.0
    %1793 = vmatprep.subr.mxu0 0.0
    %1794 = vmatpush1.msra.mxu0 0.0
    %1795 = vmatprep.subr.mxu0 0.0
    %1796 = vmatpush1.msra.mxu0 0.0
    %1797 = vmatprep.subr.mxu0 0.0
    %1798 = vmatpush1.msra.mxu0 0.0
    %1799 = vmatprep.subr.mxu0 0.0
    %1800 = vmatpush1.msra.mxu0 0.0
    %1801 = vmatprep.subr.mxu0 0.0
    %1802 = vmatpush1.msra.mxu0 0.0
    %1803 = vmatprep.subr.mxu0 0.0
    %1804 = vmatpush1.msra.mxu0 0.0
    %1805 = vmatprep.subr.mxu0 0.0
    %1806 = vmatpush1.msra.mxu0 0.0
    %1807 = vmatprep.subr.mxu0 0.0
    %1808 = vmatpush1.msra.mxu0 0.0
    %1809 = vmatprep.subr.mxu0 0.0
    %1810 = vmatpush1.msra.mxu0 0.0
    %1811 = vmatprep.subr.mxu0 0.0
    %1812 = vmatpush1.msra.mxu0 0.0
    %1813 = vmatprep.subr.mxu0 0.0
    %1814 = vmatpush1.msra.mxu0 0.0
    %1815 = vmatprep.subr.mxu0 0.0
    %1816 = vmatpush1.msra.mxu0 0.0
    %1817 = vmatprep.subr.mxu0 0.0
    %1818 = vmatpush1.msra.mxu0 0.0
    %1819 = vmatprep.subr.mxu0 0.0
    %1820 = vmatpush1.msra.mxu0 %v1712
    %1821 = vmatprep.subr.mxu0 0.0
    %1822 = vmatpush2.msra.mxu0 0.0
    %1823 = vmatprep.subr.mxu0 0.0
    %1824 = vmatpush2.msra.mxu0 0.0
    %1825 = vmatprep.subr.mxu0 0.0
    %1826 = vmatpush2.msra.mxu0 0.0
    %1827 = vmatprep.subr.mxu0 0.0
    %1828 = vmatpush2.msra.mxu0 0.0
    %1829 = vmatprep.subr.mxu0 0.0
    %1830 = vmatpush2.msra.mxu0 0.0
    %1831 = vmatprep.subr.mxu0 0.0
    %1832 = vmatpush2.msra.mxu0 0.0
    %1833 = vmatprep.subr.mxu0 0.0
    %1834 = vmatpush2.msra.mxu0 0.0
    %1835 = vmatprep.subr.mxu0 0.0
    %1836 = vmatpush2.msra.mxu0 0.0
    %1837 = vmatprep.subr.mxu0 0.0
    %1838 = vmatpush2.msra.mxu0 0.0
    %1839 = vmatprep.subr.mxu0 0.0
    %1840 = vmatpush2.msra.mxu0 0.0
    %1841 = vmatprep.subr.mxu0 0.0
    %1842 = vmatpush2.msra.mxu0 0.0
    %1843 = vmatprep.subr.mxu0 0.0
    %1844 = vmatpush2.msra.mxu0 0.0
    %1845 = vmatprep.subr.mxu0 0.0
    %1846 = vmatpush2.msra.mxu0 0.0
    %1847 = vmatprep.subr.mxu0 0.0
    %1848 = vmatpush2.msra.mxu0 0.0
    %1849 = vmatprep.subr.mxu0 0.0
    %1850 = vmatpush2.msra.mxu0 0.0
    %1851 = vmatprep.subr.mxu0 0.0
    %1852 = vmatpush2.msra.mxu0 0.0
    %1853 = vmatprep.mubr.f32.mxu0 0.0
    %1854 = vmatmul.mubr.f32.gmra.mxu0 %v1787
    %v1855 = vpop.f32.mrf.mxu0
    %v1856 = vadd.f32 0.0, %v1855
    %v1857 = vpop.f32.mrf.mxu0
    %1858 = vdwg.mxu0
    %v1859 = vlaneseq
    %v1860 = vshrl.u32 %v1859, 7
    %v1861 = vsub.s32 0, %v1860
    %v1862 = vrot.slane %v1783, %v1861
    %v1863 = vmul.f32 %v1274, %v1862
    %v1864 = vmul.f32 %v1275, %v1862
    %v1865 = vlaneseq
    %v1866 = vshrl.u32 %v1865, 7
    %v1867 = vsub.s32 0, %v1866
    %v1868 = vrot.slane %v1856, %v1867
    %v1869 = vadd.f32 %v1863, %v1868
    %v1870 = vadd.f32 %v1864, %v1868
    %vm1871 = vcmp.ge.f32.partialorder %v1869, 0.0
    %vm1872 = vcmp.ge.f32.partialorder %v1870, 0.0
    %v1873 = vmul.f32 %v1869, 0.01
    %v1874 = vmul.f32 %v1870, 0.01
    %v1875 = vsel %vm1871, %v1869, %v1873
    %v1876 = vsel %vm1872, %v1870, %v1874
    %1877 = vst [vmem:[#allocation9] sm:$0xff] %v1875
    %1878 = vst [vmem:[#allocation9 + $0x8] sm:$0xff] %v1876
    %v1879 = vmul.f32 %v1507, %v1862
    %v1880 = vmul.f32 %v1508, %v1862
    %v1881 = vadd.f32 %v1879, %v1868
    %v1882 = vadd.f32 %v1880, %v1868
    %vm1883 = vcmp.ge.f32.partialorder %v1881, 0.0
    %vm1884 = vcmp.ge.f32.partialorder %v1882, 0.0
    %v1885 = vmul.f32 %v1881, 0.01
    %v1886 = vmul.f32 %v1882, 0.01
    %v1887 = vsel %vm1883, %v1881, %v1885
    %v1888 = vsel %vm1884, %v1882, %v1886
    %1889 = vst [vmem:[#allocation9 + $0x10] sm:$0xff] %v1887
    %1890 = vst [vmem:[#allocation9 + $0x18] sm:$0xff] %v1888
    // Predicated region
    $region46: #{tpu_custom_call.1} parent=1 // pred_check
      _
    $region47: #{tpu_custom_call.1} parent=1 // pred_check_branch
      %1892 = sbr.rel (0) target = $region49
    $region48: #{tpu_custom_call.1} parent=1 // pred_region
      %s1894 = ssub.s32 512, 512
      %1895 = vsyncadd [#allocation6], %s1894
      %s1896 = sshll.u32 [#allocation9], 4
      %s1897 = int_to_ptr.vmem [resolvable:$true] %s1896
      %1902 = dma.vmem_to_hbm [thread:$0]  %s1897, 512, %s9, [#allocation6], 128, 128, 8
    $region49: #{tpu_custom_call.1} parent=1 // pred_fallthru
      _
    // Predicated region
    $region50: #{tpu_custom_call.1} parent=1 // pred_check
      _
    $region51: #{tpu_custom_call.1} parent=1 // pred_check_branch
      %1904 = sbr.rel (0) target = $region53
    $region52: #{tpu_custom_call.1} parent=1 // pred_region
      %1905 = dma.done [#allocation6], 512
    $region53: #{tpu_custom_call.1} parent=1 // pred_fallthru
      _
    %1906 = vsyncpa [#allocation5], 1
    %1907 = vsyncpa [#allocation8], 1
    %1908 = vsyncpa [#allocation6], 1

</llo_original>
